<compile_context>
chip_gen: v5e
topology: v5e:2x2
jax: 0.10.0
libtpu: 0.0.40
codegen_flags: <defaults>
</compile_context>

<pallas_src>
import functools
import math

import jax
import jax.numpy as jnp
import numpy as np
from jax import lax
from jax.experimental import pallas as pl
from jax.experimental.pallas import tpu as pltpu

LN_EPS = 1e-12                       # the repo's custom LayerNorm uses eps=1e-12
VMEM_LIMIT = 64 * 1024 * 1024        # explicit scoped-VMEM budget (v5e default is only 16 MiB)


def _pick_tile(dim, pref):
    """Full dim if small / non-divisible (correctness), else the preferred aligned tile."""
    if dim <= pref or dim % pref != 0:
        return dim
    return pref


def _round_up(x, m):
    return (x + m - 1) // m * m


# ---------------------------------------------------------------------------
# Tiled matmul + bias (final vocab projection), padded to tile multiples
# ---------------------------------------------------------------------------

def _matmul_bias_kernel(x_ref, w_ref, b_ref, o_ref, acc_ref):
    k = pl.program_id(2)

    @pl.when(k == 0)
    def _():
        acc_ref[...] = jnp.zeros_like(acc_ref)

    # bf16 operands straight from HBM -> MXU, f32 accumulation
    acc_ref[...] += jnp.dot(x_ref[...], w_ref[...], preferred_element_type=jnp.float32)

    @pl.when(k == pl.num_programs(2) - 1)
    def _():
        o_ref[...] = (acc_ref[...] + b_ref[...].astype(jnp.float32)).astype(o_ref.dtype)


def pallas_matmul_bias(x2d, w, b, out_dtype=None, tm=256, tn=512, tk=512):
    """x2d: (M, K) bf16, w: (K, N) bf16, b: (N,) f32 -> x2d @ w + b (out_dtype)."""
    M, K = x2d.shape
    N = w.shape[1]
    out_dtype = out_dtype or x2d.dtype
    TM = min(tm, _round_up(M, 8))
    TK = min(tk, _round_up(K, 128))
    TN = min(tn, _round_up(N, 128))
    Mp, Kp, Np = _round_up(M, TM), _round_up(K, TK), _round_up(N, TN)
    x_p = jnp.pad(x2d, ((0, Mp - M), (0, Kp - K)))
    w_p = jnp.pad(w, ((0, Kp - K), (0, Np - N)))
    b_p = jnp.pad(b, (0, Np - N)).reshape(1, Np)
    grid = (Mp // TM, Np // TN, Kp // TK)
    out = pl.pallas_call(
        _matmul_bias_kernel,
        out_shape=jax.ShapeDtypeStruct((Mp, Np), out_dtype),
        grid=grid,
        in_specs=[
            pl.BlockSpec((TM, TK), lambda i, j, k: (i, k)),
            pl.BlockSpec((TK, TN), lambda i, j, k: (k, j)),
            pl.BlockSpec((1, TN), lambda i, j, k: (0, j)),
        ],
        out_specs=pl.BlockSpec((TM, TN), lambda i, j, k: (i, j)),
        scratch_shapes=[pltpu.VMEM((TM, TN), jnp.float32)],
        compiler_params=pltpu.CompilerParams(
            dimension_semantics=("parallel", "parallel", "arbitrary"),
            vmem_limit_bytes=VMEM_LIMIT),
    )(x_p, w_p, b_p)
    return out[:M, :N]


# ---------------------------------------------------------------------------
# Fused attention sublayer: QKV proj -> MHA -> output proj -> +residual -> LN
# ---------------------------------------------------------------------------

def _attn_sublayer_kernel(xq_ref, xkv_ref, bias_ref, wqkv_ref, bqkv_ref,
                          wo_ref, bo_ref, g_ref, beta_ref, o_ref,
                          q_sc, k_sc, v_sc, ctx_sc,
                          *, n_head, scale, eps, fused_qkv):
    D = wo_ref.shape[0]
    dh = D // n_head

    xq = xq_ref[0]                                   # (TQ, D) bf16 (also the residual)

    # ---- QKV projection: bf16 operands on the MXU, f32 accumulation ----
    if fused_qkv:
        # self-attention, single q-tile: one (TQ, D) @ (D, 3D) matmul
        qkv = jnp.dot(xq, wqkv_ref[...],
                      preferred_element_type=jnp.float32) + bqkv_ref[...].astype(jnp.float32)
        q_sc[...] = qkv[:, :D].astype(jnp.bfloat16)
        k_sc[...] = qkv[:, D:2 * D].astype(jnp.bfloat16)
        v_sc[...] = qkv[:, 2 * D:].astype(jnp.bfloat16)
    else:
        xkv = xkv_ref[0]                             # (Lk, D) bf16
        q = jnp.dot(xq, wqkv_ref[:, :D],
                    preferred_element_type=jnp.float32) + bqkv_ref[:, :D].astype(jnp.float32)
        # K and V fused into a single (D, 2D) matmul
        kv = jnp.dot(xkv, wqkv_ref[:, D:],
                     preferred_element_type=jnp.float32) + bqkv_ref[:, D:].astype(jnp.float32)
        q_sc[...] = q.astype(jnp.bfloat16)
        k_sc[...] = kv[:, :D].astype(jnp.bfloat16)
        v_sc[...] = kv[:, D:].astype(jnp.bfloat16)

    # additive mask bias, hoisted out of the head loop (pre-baked in the wrapper)
    bias = bias_ref[0].astype(jnp.float32)           # (TQ | 1, Lk), broadcasts over rows

    # ---- per-head attention; contexts land in a VMEM scratch so the output
    #      projection is ONE (TQ, D) @ (D, D) matmul with a full-D contraction ----
    for h in range(n_head):
        qh = q_sc[:, h * dh:(h + 1) * dh]            # ref-backed slices -> bounded live ranges
        kh = k_sc[:, h * dh:(h + 1) * dh]
        vh = v_sc[:, h * dh:(h + 1) * dh]
        s = lax.dot_general(qh, kh, (((1,), (1,)), ((), ())),
                            preferred_element_type=jnp.float32)   # (TQ, Lk), no k.T transpose
        s = s * scale + bias
        s = s - jnp.max(s, axis=-1, keepdims=True)
        p = jnp.exp(s)
        p = p * pl.reciprocal(jnp.sum(p, axis=-1, keepdims=True), approx=True)
        ctx_sc[:, h * dh:(h + 1) * dh] = jnp.dot(
            p.astype(jnp.bfloat16), vh, preferred_element_type=jnp.float32
        ).astype(jnp.bfloat16)

    # ---- output projection + residual add + LayerNorm (f32 math) ----
    out = jnp.dot(ctx_sc[...], wo_ref[...],
                  preferred_element_type=jnp.float32) + bo_ref[...].astype(jnp.float32)
    y = out + xq.astype(jnp.float32)
    mean = jnp.mean(y, axis=-1, keepdims=True)
    var = jnp.mean((y - mean) ** 2, axis=-1, keepdims=True)
    y = (y - mean) * lax.rsqrt(var + eps)
    o_ref[0] = (y * g_ref[...] + beta_ref[...]).astype(o_ref.dtype)


def attn_sublayer(ap, gamma, beta, x_q, x_kv, bias, n_head, self_attn):
    """One fused attention sublayer. x_q: (B,Lq,D) bf16, x_kv: (B,Lk,D) bf16,
    bias: additive mask bias, compact (1|B, 1|Lq, Lk) f32.
    Returns LayerNorm(MHA(x_q, x_kv) + x_q) in bf16."""
    B, Lq, D = x_q.shape
    Lk = x_kv.shape[1]
    dh = D // n_head
    TQ = _pick_tile(Lq, 128)                 # bound live q/scores/ctx; >= 2*B steps for megacore
    fused_qkv = bool(self_attn) and (TQ == Lq)

    mB, mq = bias.shape[0], bias.shape[1]
    assert mq == 1 or mq == Lq
    blk_mq = TQ if mq > 1 else 1
    bias_im = lambda b, qi: ((b if mB > 1 else 0), (qi if mq > 1 else 0), 0)

    kernel = functools.partial(_attn_sublayer_kernel, n_head=n_head,
                               scale=1.0 / math.sqrt(dh), eps=LN_EPS,
                               fused_qkv=fused_qkv)
    return pl.pallas_call(
        kernel,
        out_shape=jax.ShapeDtypeStruct((B, Lq, D), x_q.dtype),
        grid=(B, Lq // TQ),
        in_specs=[
            pl.BlockSpec((1, TQ, D), lambda b, qi: (b, qi, 0)),
            pl.BlockSpec((1, Lk, D), lambda b, qi: (b, 0, 0)),
            pl.BlockSpec((1, blk_mq, Lk), bias_im),
            pl.BlockSpec((D, 3 * D), lambda b, qi: (0, 0)),   # bf16, constant index -> resident
            pl.BlockSpec((1, 3 * D), lambda b, qi: (0, 0)),
            pl.BlockSpec((D, D), lambda b, qi: (0, 0)),
            pl.BlockSpec((1, D), lambda b, qi: (0, 0)),
            pl.BlockSpec((1, D), lambda b, qi: (0, 0)),
            pl.BlockSpec((1, D), lambda b, qi: (0, 0)),
        ],
        out_specs=pl.BlockSpec((1, TQ, D), lambda b, qi: (b, qi, 0)),
        scratch_shapes=[pltpu.VMEM((TQ, D), jnp.bfloat16),    # q
                        pltpu.VMEM((Lk, D), jnp.bfloat16),    # k
                        pltpu.VMEM((Lk, D), jnp.bfloat16),    # v
                        pltpu.VMEM((TQ, D), jnp.bfloat16)],   # ctx
        compiler_params=pltpu.CompilerParams(
            dimension_semantics=("parallel", "parallel"),
            vmem_limit_bytes=VMEM_LIMIT),
    )(x_q, x_kv, bias,
      ap["wqkv"], ap["bqkv"].reshape(1, 3 * D),
      ap["wo"], ap["bo"].reshape(1, D),
      gamma.reshape(1, D), beta.reshape(1, D))


# ---------------------------------------------------------------------------
# Fused FFN sublayer: w1 + ReLU + w2 (H-tiled reduction) -> +residual -> LN
# ---------------------------------------------------------------------------

def _ffn_sublayer_kernel(x_ref, w1_ref, b1_ref, w2_ref, b2_ref, g_ref, beta_ref,
                         o_ref, acc_ref, *, eps):
    t = pl.program_id(1)

    @pl.when(t == 0)
    def _():
        acc_ref[...] = jnp.zeros_like(acc_ref)

    # y = sum_t relu(x @ w1[:, t] + b1[t]) @ w2[t, :]   (exact H-tiled decomposition)
    h = jnp.dot(x_ref[...], w1_ref[...],
                preferred_element_type=jnp.float32) + b1_ref[...].astype(jnp.float32)
    h = jnp.maximum(h, 0.0).astype(jnp.bfloat16)      # (TM, TH) stays in vregs/VMEM
    acc_ref[...] += jnp.dot(h, w2_ref[...], preferred_element_type=jnp.float32)

    @pl.when(t == pl.num_programs(1) - 1)
    def _():
        y = acc_ref[...] + b2_ref[...].astype(jnp.float32) + x_ref[...].astype(jnp.float32)
        mean = jnp.mean(y, axis=-1, keepdims=True)
        var = jnp.mean((y - mean) ** 2, axis=-1, keepdims=True)
        y = (y - mean) * lax.rsqrt(var + eps)
        o_ref[...] = (y * g_ref[...] + beta_ref[...]).astype(o_ref.dtype)


def ffn_sublayer(lp, x):
    B, L, D = x.shape
    M = B * L
    H = lp["w1"].shape[1]
    TM = _pick_tile(M, 128)     # 128 rows: intermediate fits vregs better (v5e single vst slot)
    TH = _pick_tile(H, 512)     # H reduction tiles: w1/w2 never fully resident in VMEM
    out = pl.pallas_call(
        functools.partial(_ffn_sublayer_kernel, eps=LN_EPS),
        out_shape=jax.ShapeDtypeStruct((M, D), x.dtype),
        grid=(M // TM, H // TH),
        in_specs=[
            pl.BlockSpec((TM, D), lambda i, t: (i, 0)),
            pl.BlockSpec((D, TH), lambda i, t: (0, t)),
            pl.BlockSpec((1, TH), lambda i, t: (0, t)),
            pl.BlockSpec((TH, D), lambda i, t: (t, 0)),
            pl.BlockSpec((1, D), lambda i, t: (0, 0)),
            pl.BlockSpec((1, D), lambda i, t: (0, 0)),
            pl.BlockSpec((1, D), lambda i, t: (0, 0)),
        ],
        out_specs=pl.BlockSpec((TM, D), lambda i, t: (i, 0)),
        scratch_shapes=[pltpu.VMEM((TM, D), jnp.float32)],
        compiler_params=pltpu.CompilerParams(
            dimension_semantics=("parallel", "arbitrary"),
            vmem_limit_bytes=VMEM_LIMIT),
    )(x.reshape(M, D), lp["w1"], lp["b1"].reshape(1, H), lp["w2"], lp["b2"].reshape(1, D),
      lp["ln3_g"].reshape(1, D), lp["ln3_b"].reshape(1, D))
    return out.reshape(B, L, D)


# ------------------------- model (glue in plain JAX) -------------------------

def decoder_layer(lp, dec, enc, trg_bias, src_bias, n_head):
    x = attn_sublayer(lp["self_attn"], lp["ln1_g"], lp["ln1_b"], dec, dec, trg_bias,
                      n_head, self_attn=True)
    x = attn_sublayer(lp["cross_attn"], lp["ln2_g"], lp["ln2_b"], x, enc, src_bias,
                      n_head, self_attn=False)
    x = ffn_sublayer(lp, x)
    return x


def decoder_forward(params, trg_ids, enc_src, trg_mask, src_mask, n_head):
    B, L = trg_ids.shape
    tok = params["emb_table"][trg_ids]                        # token embedding gather (glue)
    x = (tok + params["pos_enc"][:L][None, :, :]).astype(jnp.bfloat16)
    enc = enc_src.astype(jnp.bfloat16)
    # pre-bake masks as compact additive biases (hoists compare/select out of the kernels)
    trg_bias = jnp.where(trg_mask[:, 0] == 0, -10000.0, 0.0).astype(jnp.float32)   # (1|B, Lq, Lq)
    src_bias = jnp.where(src_mask[:, 0] == 0, -10000.0, 0.0).astype(jnp.float32)   # (B|1, 1, Lk)
    # dropout == identity (eval mode)
    for lp in params["layers"]:
        x = decoder_layer(lp, x, enc, trg_bias, src_bias, n_head)
    D = x.shape[-1]
    logits = pallas_matmul_bias(x.reshape(B * L, D), params["w_out"], params["b_out"],
                                out_dtype=jnp.bfloat16)
    return logits.reshape(B, L, -1)


# ------------------------------ parameter init ------------------------------

def _linear_params(key, d_in, d_out):
    kw, kb = jax.random.split(key)
    bound = 1.0 / math.sqrt(d_in)
    w = jax.random.uniform(kw, (d_in, d_out), jnp.float32, -bound, bound)
    b = jax.random.uniform(kb, (d_out,), jnp.float32, -bound, bound)
    return w, b


def _attn_params(keys, d_model):
    wq, bq = _linear_params(keys[0], d_model, d_model)
    wk, bk = _linear_params(keys[1], d_model, d_model)
    wv, bv = _linear_params(keys[2], d_model, d_model)
    wo, bo = _linear_params(keys[3], d_model, d_model)
    return dict(wqkv=jnp.concatenate([wq, wk, wv], axis=1).astype(jnp.bfloat16),  # (D, 3D)
                bqkv=jnp.concatenate([bq, bk, bv], axis=0),                        # (3D,) f32
                wo=wo.astype(jnp.bfloat16), bo=bo)


def sinusoidal_pos_enc(max_len, d_model):
    pos = np.arange(max_len)[:, None].astype(np.float32)
    i2 = np.arange(0, d_model, 2).astype(np.float32)
    angles = pos / np.power(10000.0, i2 / d_model)
    pe = np.zeros((max_len, d_model), np.float32)
    pe[:, 0::2] = np.sin(angles)
    pe[:, 1::2] = np.cos(angles)
    return jnp.asarray(pe)


def init_params(key, voc, max_len, d_model, ffn_hidden, n_head, n_layers):
    keys = jax.random.split(key, 2 + n_layers)
    emb = jax.random.normal(keys[0], (voc, d_model), jnp.float32) * 0.02
    emb = emb.at[1].set(0.0)   # padding_idx = 1 (TokenEmbedding)
    layers = []
    for l in range(n_layers):
        lk = jax.random.split(keys[1 + l], 10)
        w1, b1 = _linear_params(lk[8], d_model, ffn_hidden)
        w2, b2 = _linear_params(lk[9], ffn_hidden, d_model)
        layers.append(dict(
            self_attn=_attn_params(lk[0:4], d_model),
            cross_attn=_attn_params(lk[4:8], d_model),
            w1=w1.astype(jnp.bfloat16), b1=b1,
            w2=w2.astype(jnp.bfloat16), b2=b2,
            ln1_g=jnp.ones((d_model,), jnp.float32), ln1_b=jnp.zeros((d_model,), jnp.float32),
            ln2_g=jnp.ones((d_model,), jnp.float32), ln2_b=jnp.zeros((d_model,), jnp.float32),
            ln3_g=jnp.ones((d_model,), jnp.float32), ln3_b=jnp.zeros((d_model,), jnp.float32),
        ))
    w_out, b_out = _linear_params(keys[-1], d_model, voc)
    return dict(emb_table=emb, pos_enc=sinusoidal_pos_enc(max_len, d_model),
                layers=layers, w_out=w_out.astype(jnp.bfloat16), b_out=b_out)


# ------------------------------ pure-JAX reference ------------------------------

def _ref_mha(p, x_q, x_kv, mask, n_head):
    B, Lq, D = x_q.shape
    Lk = x_kv.shape[1]
    dh = D // n_head
    wqkv = p["wqkv"].astype(jnp.float32)
    wq, wk, wv = wqkv[:, :D], wqkv[:, D:2 * D], wqkv[:, 2 * D:]
    bq, bk, bv = p["bqkv"][:D], p["bqkv"][D:2 * D], p["bqkv"][2 * D:]
    q = x_q @ wq + bq
    k = x_kv @ wk + bk
    v = x_kv @ wv + bv

    def split(t, L):
        return t.reshape(B, L, n_head, dh).transpose(0, 2, 1, 3)

    q, k, v = split(q, Lq), split(k, Lk), split(v, Lk)
    s = jnp.einsum("bhqd,bhkd->bhqk", q, k) / math.sqrt(dh)
    s = jnp.where(jnp.broadcast_to(mask, s.shape) == 0, -10000.0, s)
    a = jax.nn.softmax(s, axis=-1)
    ctx = jnp.einsum("bhqk,bhkd->bhqd", a, v).transpose(0, 2, 1, 3).reshape(B, Lq, D)
    return ctx @ p["wo"].astype(jnp.float32) + p["bo"]


def _ref_layernorm(x, g, b, eps=LN_EPS):
    mean = jnp.mean(x, axis=-1, keepdims=True)
    var = jnp.mean((x - mean) ** 2, axis=-1, keepdims=True)
    return (x - mean) / jnp.sqrt(var + eps) * g + b


def ref_decoder(params, trg_ids, enc_src, trg_mask, src_mask, n_head):
    x = params["emb_table"][trg_ids] + params["pos_enc"][: trg_ids.shape[1]][None]
    for p in params["layers"]:
        h = _ref_mha(p["self_attn"], x, x, trg_mask, n_head)
        x = _ref_layernorm(h + x, p["ln1_g"], p["ln1_b"])
        h = _ref_mha(p["cross_attn"], x, enc_src, src_mask, n_head)
        x = _ref_layernorm(h + x, p["ln2_g"], p["ln2_b"])
        h = jnp.maximum(x @ p["w1"].astype(jnp.float32) + p["b1"], 0.0) \
            @ p["w2"].astype(jnp.float32) + p["b2"]
        x = _ref_layernorm(h + x, p["ln3_g"], p["ln3_b"])
    return x @ params["w_out"].astype(jnp.float32) + params["b_out"]


# ------------------------------------ main ------------------------------------

if __name__ == "__main__":
    dec_voc_size, max_len, d_model, ffn_hidden, n_head, n_layers = 50, 16, 32, 64, 4, 2
    B, Lq, Lk = 2, 8, 12

    key = jax.random.PRNGKey(0)
    kp, kt, ke = jax.random.split(key, 3)
    params = init_params(kp, dec_voc_size, max_len, d_model, ffn_hidden, n_head, n_layers)

    trg = jax.random.randint(kt, (B, Lq), 0, dec_voc_size)                 # token ids
    enc_src = jax.random.normal(ke, (B, Lk, d_model), jnp.float32)         # encoder output
    trg_mask = jnp.tril(jnp.ones((Lq, Lq), jnp.float32))[None, None]       # (1,1,Lq,Lq) causal
    src_len = jnp.array([Lk, Lk - 3])
    src_mask = (jnp.arange(Lk)[None, :] < src_len[:, None]).astype(jnp.float32)[:, None, None, :]  # (B,1,1,Lk)

    out = decoder_forward(params, trg, enc_src, trg_mask, src_mask, n_head)
    out = jax.block_until_ready(out)

    ref = ref_decoder(params, trg, enc_src, trg_mask, src_mask, n_head)
    assert out.shape == (B, Lq, dec_voc_size)
    np.testing.assert_allclose(np.asarray(out.astype(jnp.float32)), np.asarray(ref),
                               rtol=5e-2, atol=5e-2)

    print("KERNEL_OK")
</pallas_src>

<mosaic_0001>
module attributes {stable_mosaic.version = 11 : i64} {
  func.func @_attn_sublayer_kernel(%arg0: i32, %arg1: i32, %arg2: memref<1x8x32xbf16, #tpu.memory_space<vmem>>, %arg3: memref<1x8x32xbf16, #tpu.memory_space<vmem>>, %arg4: memref<1x8x8xf32, #tpu.memory_space<vmem>>, %arg5: memref<32x96xbf16, #tpu.memory_space<vmem>>, %arg6: memref<1x96xf32, #tpu.memory_space<vmem>>, %arg7: memref<32x32xbf16, #tpu.memory_space<vmem>>, %arg8: memref<1x32xf32, #tpu.memory_space<vmem>>, %arg9: memref<1x32xf32, #tpu.memory_space<vmem>>, %arg10: memref<1x32xf32, #tpu.memory_space<vmem>>, %arg11: memref<1x8x32xbf16, #tpu.memory_space<vmem>>, %arg12: memref<8x32xbf16, #tpu.memory_space<vmem>>, %arg13: memref<8x32xbf16, #tpu.memory_space<vmem>>, %arg14: memref<8x32xbf16, #tpu.memory_space<vmem>>, %arg15: memref<8x32xbf16, #tpu.memory_space<vmem>>) attributes {dimension_semantics = [#tpu.dimension_semantics<parallel>, #tpu.dimension_semantics<parallel>], iteration_bounds = array<i64: 2, 1>, scalar_prefetch = 0 : i64, scratch_operands = 4 : i64, tpu.core_type = #tpu.core_type<tc>, window_params = [{transform_indices = @transform_0, window_bounds = array<i64: 1, 8, 32>}, {transform_indices = @transform_1, window_bounds = array<i64: 1, 8, 32>}, {transform_indices = @transform_2, window_bounds = array<i64: 1, 8, 8>}, {pipeline_mode = #tpu.pipeline_mode<synchronous>, transform_indices = @transform_3, window_bounds = array<i64: 32, 96>}, {pipeline_mode = #tpu.pipeline_mode<synchronous>, transform_indices = @transform_4, window_bounds = array<i64: 1, 96>}, {pipeline_mode = #tpu.pipeline_mode<synchronous>, transform_indices = @transform_5, window_bounds = array<i64: 32, 32>}, {pipeline_mode = #tpu.pipeline_mode<synchronous>, transform_indices = @transform_6, window_bounds = array<i64: 1, 32>}, {pipeline_mode = #tpu.pipeline_mode<synchronous>, transform_indices = @transform_7, window_bounds = array<i64: 1, 32>}, {pipeline_mode = #tpu.pipeline_mode<synchronous>, transform_indices = @transform_8, window_bounds = array<i64: 1, 32>}, {transform_indices = @transform_9, window_bounds = array<i64: 1, 8, 32>}]} {
    %c0 = arith.constant 0 : index
    %c0_0 = arith.constant 0 : index
    %c0_1 = arith.constant 0 : index
    %0 = vector.load %arg2[%c0, %c0_0, %c0_1] : memref<1x8x32xbf16, #tpu.memory_space<vmem>>, vector<1x8x32xbf16>
    %1 = vector.shape_cast %0 : vector<1x8x32xbf16> to vector<8x32xbf16>
    %c0_2 = arith.constant 0 : index
    %c0_3 = arith.constant 0 : index
    %2 = vector.load %arg5[%c0_2, %c0_3] : memref<32x96xbf16, #tpu.memory_space<vmem>>, vector<32x96xbf16>
    %cst = arith.constant dense<0.000000e+00> : vector<8x96xf32>
    %3 = tpu.matmul %1, %2, %cst {dimension_numbers = #tpu.dot_dimension_numbers<[1], [0], [0], [1], [0, 0, 1, 1], [], []>} : vector<8x32xbf16>, vector<32x96xbf16>, vector<8x96xf32> -> vector<8x96xf32>
    %c0_4 = arith.constant 0 : index
    %c0_5 = arith.constant 0 : index
    %4 = vector.load %arg6[%c0_4, %c0_5] : memref<1x96xf32, #tpu.memory_space<vmem>>, vector<1x96xf32>
    %5 = vector.broadcast %4 : vector<1x96xf32> to vector<8x96xf32>
    %6 = arith.addf %3, %5 : vector<8x96xf32>
    %7 = vector.extract_strided_slice %6 {offsets = [0, 0], sizes = [8, 32], strides = [1, 1]} : vector<8x96xf32> to vector<8x32xf32>
    %8 = arith.truncf %7 : vector<8x32xf32> to vector<8x32xbf16>
    %c0_6 = arith.constant 0 : index
    %c0_7 = arith.constant 0 : index
    %9 = vector.load %arg12[%c0_6, %c0_7] : memref<8x32xbf16, #tpu.memory_space<vmem>>, vector<8x32xbf16>
    tpu.vector_store %arg12[%c0_6, %c0_7], %8 {strides = array<i32>} : memref<8x32xbf16, #tpu.memory_space<vmem>>, vector<8x32xbf16>,
    %10 = vector.extract_strided_slice %6 {offsets = [0, 32], sizes = [8, 32], strides = [1, 1]} : vector<8x96xf32> to vector<8x32xf32>
    %11 = arith.truncf %10 : vector<8x32xf32> to vector<8x32xbf16>
    %c0_8 = arith.constant 0 : index
    %c0_9 = arith.constant 0 : index
    %12 = vector.load %arg13[%c0_8, %c0_9] : memref<8x32xbf16, #tpu.memory_space<vmem>>, vector<8x32xbf16>
    tpu.vector_store %arg13[%c0_8, %c0_9], %11 {strides = array<i32>} : memref<8x32xbf16, #tpu.memory_space<vmem>>, vector<8x32xbf16>,
    %13 = vector.extract_strided_slice %6 {offsets = [0, 64], sizes = [8, 32], strides = [1, 1]} : vector<8x96xf32> to vector<8x32xf32>
    %14 = arith.truncf %13 : vector<8x32xf32> to vector<8x32xbf16>
    %c0_10 = arith.constant 0 : index
    %c0_11 = arith.constant 0 : index
    %15 = vector.load %arg14[%c0_10, %c0_11] : memref<8x32xbf16, #tpu.memory_space<vmem>>, vector<8x32xbf16>
    tpu.vector_store %arg14[%c0_10, %c0_11], %14 {strides = array<i32>} : memref<8x32xbf16, #tpu.memory_space<vmem>>, vector<8x32xbf16>,
    %c0_12 = arith.constant 0 : index
    %c0_13 = arith.constant 0 : index
    %c0_14 = arith.constant 0 : index
    %16 = vector.load %arg4[%c0_12, %c0_13, %c0_14] : memref<1x8x8xf32, #tpu.memory_space<vmem>>, vector<1x8x8xf32>
    %17 = vector.shape_cast %16 : vector<1x8x8xf32> to vector<8x8xf32>
    %c0_15 = arith.constant 0 : index
    %c0_16 = arith.constant 0 : index
    %18 = vector.load %arg12[%c0_15, %c0_16] : memref<8x32xbf16, #tpu.memory_space<vmem>>, vector<8x8xbf16>
    %c0_17 = arith.constant 0 : index
    %c0_18 = arith.constant 0 : index
    %19 = vector.load %arg13[%c0_17, %c0_18] : memref<8x32xbf16, #tpu.memory_space<vmem>>, vector<8x8xbf16>
    %c0_19 = arith.constant 0 : index
    %c0_20 = arith.constant 0 : index
    %20 = vector.load %arg14[%c0_19, %c0_20] : memref<8x32xbf16, #tpu.memory_space<vmem>>, vector<8x8xbf16>
    %cst_21 = arith.constant dense<0.000000e+00> : vector<8x8xf32>
    %21 = tpu.matmul %18, %19, %cst_21 {dimension_numbers = #tpu.dot_dimension_numbers<[1], [1], [0], [0], [0, 0, 1, 0], [], []>} : vector<8x8xbf16>, vector<8x8xbf16>, vector<8x8xf32> -> vector<8x8xf32>
    %cst_22 = arith.constant 0.353553385 : f32
    %22 = vector.broadcast %cst_22 : f32 to vector<8x8xf32>
    %23 = arith.mulf %21, %22 : vector<8x8xf32>
    %24 = arith.addf %23, %17 : vector<8x8xf32>
    %cst_23 = arith.constant dense<0xFF800000> : vector<8xf32>
    %25 = vector.multi_reduction <maximumf>, %24, %cst_23 [1] : vector<8x8xf32> to vector<8xf32>
    %26 = vector.shape_cast %25 : vector<8xf32> to vector<8x1xf32>
    %27 = vector.broadcast %26 : vector<8x1xf32> to vector<8x8xf32>
    %28 = arith.subf %24, %27 : vector<8x8xf32>
    %29 = math.exp %28 : vector<8x8xf32>
    %cst_24 = arith.constant dense<0.000000e+00> : vector<8xf32>
    %30 = vector.multi_reduction <add>, %29, %cst_24 [1] : vector<8x8xf32> to vector<8xf32>
    %31 = vector.shape_cast %30 : vector<8xf32> to vector<8x1xf32>
    %32 = tpu.reciprocal %31 {approx = true} : vector<8x1xf32> -> vector<8x1xf32>
    %33 = vector.broadcast %32 : vector<8x1xf32> to vector<8x8xf32>
    %34 = arith.mulf %29, %33 : vector<8x8xf32>
    %35 = arith.truncf %34 : vector<8x8xf32> to vector<8x8xbf16>
    %cst_25 = arith.constant dense<0.000000e+00> : vector<8x8xf32>
    %36 = tpu.matmul %35, %20, %cst_25 {dimension_numbers = #tpu.dot_dimension_numbers<[1], [0], [0], [1], [0, 0, 1, 1], [], []>} : vector<8x8xbf16>, vector<8x8xbf16>, vector<8x8xf32> -> vector<8x8xf32>
    %37 = arith.truncf %36 : vector<8x8xf32> to vector<8x8xbf16>
    %c0_26 = arith.constant 0 : index
    %c0_27 = arith.constant 0 : index
    %38 = vector.load %arg15[%c0_26, %c0_27] : memref<8x32xbf16, #tpu.memory_space<vmem>>, vector<8x8xbf16>
    tpu.vector_store %arg15[%c0_26, %c0_27], %37 {strides = array<i32>} : memref<8x32xbf16, #tpu.memory_space<vmem>>, vector<8x8xbf16>,
    %c0_28 = arith.constant 0 : index
    %c8 = arith.constant 8 : index
    %39 = vector.load %arg12[%c0_28, %c8] : memref<8x32xbf16, #tpu.memory_space<vmem>>, vector<8x8xbf16>
    %c0_29 = arith.constant 0 : index
    %c8_30 = arith.constant 8 : index
    %40 = vector.load %arg13[%c0_29, %c8_30] : memref<8x32xbf16, #tpu.memory_space<vmem>>, vector<8x8xbf16>
    %c0_31 = arith.constant 0 : index
    %c8_32 = arith.constant 8 : index
    %41 = vector.load %arg14[%c0_31, %c8_32] : memref<8x32xbf16, #tpu.memory_space<vmem>>, vector<8x8xbf16>
    %cst_33 = arith.constant dense<0.000000e+00> : vector<8x8xf32>
    %42 = tpu.matmul %39, %40, %cst_33 {dimension_numbers = #tpu.dot_dimension_numbers<[1], [1], [0], [0], [0, 0, 1, 0], [], []>} : vector<8x8xbf16>, vector<8x8xbf16>, vector<8x8xf32> -> vector<8x8xf32>
    %cst_34 = arith.constant 0.353553385 : f32
    %43 = vector.broadcast %cst_34 : f32 to vector<8x8xf32>
    %44 = arith.mulf %42, %43 : vector<8x8xf32>
    %45 = arith.addf %44, %17 : vector<8x8xf32>
    %cst_35 = arith.constant dense<0xFF800000> : vector<8xf32>
    %46 = vector.multi_reduction <maximumf>, %45, %cst_35 [1] : vector<8x8xf32> to vector<8xf32>
    %47 = vector.shape_cast %46 : vector<8xf32> to vector<8x1xf32>
    %48 = vector.broadcast %47 : vector<8x1xf32> to vector<8x8xf32>
    %49 = arith.subf %45, %48 : vector<8x8xf32>
    %50 = math.exp %49 : vector<8x8xf32>
    %cst_36 = arith.constant dense<0.000000e+00> : vector<8xf32>
    %51 = vector.multi_reduction <add>, %50, %cst_36 [1] : vector<8x8xf32> to vector<8xf32>
    %52 = vector.shape_cast %51 : vector<8xf32> to vector<8x1xf32>
    %53 = tpu.reciprocal %52 {approx = true} : vector<8x1xf32> -> vector<8x1xf32>
    %54 = vector.broadcast %53 : vector<8x1xf32> to vector<8x8xf32>
    %55 = arith.mulf %50, %54 : vector<8x8xf32>
    %56 = arith.truncf %55 : vector<8x8xf32> to vector<8x8xbf16>
    %cst_37 = arith.constant dense<0.000000e+00> : vector<8x8xf32>
    %57 = tpu.matmul %56, %41, %cst_37 {dimension_numbers = #tpu.dot_dimension_numbers<[1], [0], [0], [1], [0, 0, 1, 1], [], []>} : vector<8x8xbf16>, vector<8x8xbf16>, vector<8x8xf32> -> vector<8x8xf32>
    %58 = arith.truncf %57 : vector<8x8xf32> to vector<8x8xbf16>
    %c0_38 = arith.constant 0 : index
    %c8_39 = arith.constant 8 : index
    %59 = vector.load %arg15[%c0_38, %c8_39] : memref<8x32xbf16, #tpu.memory_space<vmem>>, vector<8x8xbf16>
    tpu.vector_store %arg15[%c0_38, %c8_39], %58 {strides = array<i32>} : memref<8x32xbf16, #tpu.memory_space<vmem>>, vector<8x8xbf16>,
    %c0_40 = arith.constant 0 : index
    %c16 = arith.constant 16 : index
    %60 = vector.load %arg12[%c0_40, %c16] : memref<8x32xbf16, #tpu.memory_space<vmem>>, vector<8x8xbf16>
    %c0_41 = arith.constant 0 : index
    %c16_42 = arith.constant 16 : index
    %61 = vector.load %arg13[%c0_41, %c16_42] : memref<8x32xbf16, #tpu.memory_space<vmem>>, vector<8x8xbf16>
    %c0_43 = arith.constant 0 : index
    %c16_44 = arith.constant 16 : index
    %62 = vector.load %arg14[%c0_43, %c16_44] : memref<8x32xbf16, #tpu.memory_space<vmem>>, vector<8x8xbf16>
    %cst_45 = arith.constant dense<0.000000e+00> : vector<8x8xf32>
    %63 = tpu.matmul %60, %61, %cst_45 {dimension_numbers = #tpu.dot_dimension_numbers<[1], [1], [0], [0], [0, 0, 1, 0], [], []>} : vector<8x8xbf16>, vector<8x8xbf16>, vector<8x8xf32> -> vector<8x8xf32>
    %cst_46 = arith.constant 0.353553385 : f32
    %64 = vector.broadcast %cst_46 : f32 to vector<8x8xf32>
    %65 = arith.mulf %63, %64 : vector<8x8xf32>
    %66 = arith.addf %65, %17 : vector<8x8xf32>
    %cst_47 = arith.constant dense<0xFF800000> : vector<8xf32>
    %67 = vector.multi_reduction <maximumf>, %66, %cst_47 [1] : vector<8x8xf32> to vector<8xf32>
    %68 = vector.shape_cast %67 : vector<8xf32> to vector<8x1xf32>
    %69 = vector.broadcast %68 : vector<8x1xf32> to vector<8x8xf32>
    %70 = arith.subf %66, %69 : vector<8x8xf32>
    %71 = math.exp %70 : vector<8x8xf32>
    %cst_48 = arith.constant dense<0.000000e+00> : vector<8xf32>
    %72 = vector.multi_reduction <add>, %71, %cst_48 [1] : vector<8x8xf32> to vector<8xf32>
    %73 = vector.shape_cast %72 : vector<8xf32> to vector<8x1xf32>
    %74 = tpu.reciprocal %73 {approx = true} : vector<8x1xf32> -> vector<8x1xf32>
    %75 = vector.broadcast %74 : vector<8x1xf32> to vector<8x8xf32>
    %76 = arith.mulf %71, %75 : vector<8x8xf32>
    %77 = arith.truncf %76 : vector<8x8xf32> to vector<8x8xbf16>
    %cst_49 = arith.constant dense<0.000000e+00> : vector<8x8xf32>
    %78 = tpu.matmul %77, %62, %cst_49 {dimension_numbers = #tpu.dot_dimension_numbers<[1], [0], [0], [1], [0, 0, 1, 1], [], []>} : vector<8x8xbf16>, vector<8x8xbf16>, vector<8x8xf32> -> vector<8x8xf32>
    %79 = arith.truncf %78 : vector<8x8xf32> to vector<8x8xbf16>
    %c0_50 = arith.constant 0 : index
    %c16_51 = arith.constant 16 : index
    %80 = vector.load %arg15[%c0_50, %c16_51] : memref<8x32xbf16, #tpu.memory_space<vmem>>, vector<8x8xbf16>
    tpu.vector_store %arg15[%c0_50, %c16_51], %79 {strides = array<i32>} : memref<8x32xbf16, #tpu.memory_space<vmem>>, vector<8x8xbf16>,
    %c0_52 = arith.constant 0 : index
    %c24 = arith.constant 24 : index
    %81 = vector.load %arg12[%c0_52, %c24] : memref<8x32xbf16, #tpu.memory_space<vmem>>, vector<8x8xbf16>
    %c0_53 = arith.constant 0 : index
    %c24_54 = arith.constant 24 : index
    %82 = vector.load %arg13[%c0_53, %c24_54] : memref<8x32xbf16, #tpu.memory_space<vmem>>, vector<8x8xbf16>
    %c0_55 = arith.constant 0 : index
    %c24_56 = arith.constant 24 : index
    %83 = vector.load %arg14[%c0_55, %c24_56] : memref<8x32xbf16, #tpu.memory_space<vmem>>, vector<8x8xbf16>
    %cst_57 = arith.constant dense<0.000000e+00> : vector<8x8xf32>
    %84 = tpu.matmul %81, %82, %cst_57 {dimension_numbers = #tpu.dot_dimension_numbers<[1], [1], [0], [0], [0, 0, 1, 0], [], []>} : vector<8x8xbf16>, vector<8x8xbf16>, vector<8x8xf32> -> vector<8x8xf32>
    %cst_58 = arith.constant 0.353553385 : f32
    %85 = vector.broadcast %cst_58 : f32 to vector<8x8xf32>
    %86 = arith.mulf %84, %85 : vector<8x8xf32>
    %87 = arith.addf %86, %17 : vector<8x8xf32>
    %cst_59 = arith.constant dense<0xFF800000> : vector<8xf32>
    %88 = vector.multi_reduction <maximumf>, %87, %cst_59 [1] : vector<8x8xf32> to vector<8xf32>
    %89 = vector.shape_cast %88 : vector<8xf32> to vector<8x1xf32>
    %90 = vector.broadcast %89 : vector<8x1xf32> to vector<8x8xf32>
    %91 = arith.subf %87, %90 : vector<8x8xf32>
    %92 = math.exp %91 : vector<8x8xf32>
    %cst_60 = arith.constant dense<0.000000e+00> : vector<8xf32>
    %93 = vector.multi_reduction <add>, %92, %cst_60 [1] : vector<8x8xf32> to vector<8xf32>
    %94 = vector.shape_cast %93 : vector<8xf32> to vector<8x1xf32>
    %95 = tpu.reciprocal %94 {approx = true} : vector<8x1xf32> -> vector<8x1xf32>
    %96 = vector.broadcast %95 : vector<8x1xf32> to vector<8x8xf32>
    %97 = arith.mulf %92, %96 : vector<8x8xf32>
    %98 = arith.truncf %97 : vector<8x8xf32> to vector<8x8xbf16>
    %cst_61 = arith.constant dense<0.000000e+00> : vector<8x8xf32>
    %99 = tpu.matmul %98, %83, %cst_61 {dimension_numbers = #tpu.dot_dimension_numbers<[1], [0], [0], [1], [0, 0, 1, 1], [], []>} : vector<8x8xbf16>, vector<8x8xbf16>, vector<8x8xf32> -> vector<8x8xf32>
    %100 = arith.truncf %99 : vector<8x8xf32> to vector<8x8xbf16>
    %c0_62 = arith.constant 0 : index
    %c24_63 = arith.constant 24 : index
    %101 = vector.load %arg15[%c0_62, %c24_63] : memref<8x32xbf16, #tpu.memory_space<vmem>>, vector<8x8xbf16>
    tpu.vector_store %arg15[%c0_62, %c24_63], %100 {strides = array<i32>} : memref<8x32xbf16, #tpu.memory_space<vmem>>, vector<8x8xbf16>,
    %c0_64 = arith.constant 0 : index
    %c0_65 = arith.constant 0 : index
    %102 = vector.load %arg15[%c0_64, %c0_65] : memref<8x32xbf16, #tpu.memory_space<vmem>>, vector<8x32xbf16>
    %c0_66 = arith.constant 0 : index
    %c0_67 = arith.constant 0 : index
    %103 = vector.load %arg7[%c0_66, %c0_67] : memref<32x32xbf16, #tpu.memory_space<vmem>>, vector<32x32xbf16>
    %cst_68 = arith.constant dense<0.000000e+00> : vector<8x32xf32>
    %104 = tpu.matmul %102, %103, %cst_68 {dimension_numbers = #tpu.dot_dimension_numbers<[1], [0], [0], [1], [0, 0, 1, 1], [], []>} : vector<8x32xbf16>, vector<32x32xbf16>, vector<8x32xf32> -> vector<8x32xf32>
    %c0_69 = arith.constant 0 : index
    %c0_70 = arith.constant 0 : index
    %105 = vector.load %arg8[%c0_69, %c0_70] : memref<1x32xf32, #tpu.memory_space<vmem>>, vector<1x32xf32>
    %106 = vector.broadcast %105 : vector<1x32xf32> to vector<8x32xf32>
    %107 = arith.addf %104, %106 : vector<8x32xf32>
    %108 = arith.extf %1 : vector<8x32xbf16> to vector<8x32xf32>
    %109 = arith.addf %107, %108 : vector<8x32xf32>
    %cst_71 = arith.constant dense<0.000000e+00> : vector<8xf32>
    %110 = vector.multi_reduction <add>, %109, %cst_71 [1] : vector<8x32xf32> to vector<8xf32>
    %111 = vector.shape_cast %110 : vector<8xf32> to vector<8x1xf32>
    %cst_72 = arith.constant 3.200000e+01 : f32
    %112 = vector.broadcast %cst_72 : f32 to vector<8x1xf32>
    %113 = arith.divf %111, %112 : vector<8x1xf32>
    %114 = vector.broadcast %113 : vector<8x1xf32> to vector<8x32xf32>
    %115 = arith.subf %109, %114 : vector<8x32xf32>
    %116 = arith.mulf %115, %115 : vector<8x32xf32>
    %cst_73 = arith.constant dense<0.000000e+00> : vector<8xf32>
    %117 = vector.multi_reduction <add>, %116, %cst_73 [1] : vector<8x32xf32> to vector<8xf32>
    %118 = vector.shape_cast %117 : vector<8xf32> to vector<8x1xf32>
    %cst_74 = arith.constant 3.200000e+01 : f32
    %119 = vector.broadcast %cst_74 : f32 to vector<8x1xf32>
    %120 = arith.divf %118, %119 : vector<8x1xf32>
    %121 = vector.broadcast %113 : vector<8x1xf32> to vector<8x32xf32>
    %122 = arith.subf %109, %121 : vector<8x32xf32>
    %cst_75 = arith.constant 9.99999996E-13 : f32
    %123 = vector.broadcast %cst_75 : f32 to vector<8x1xf32>
    %124 = arith.addf %120, %123 : vector<8x1xf32>
    %125 = math.rsqrt %124 : vector<8x1xf32>
    %126 = vector.broadcast %125 : vector<8x1xf32> to vector<8x32xf32>
    %127 = arith.mulf %122, %126 : vector<8x32xf32>
    %c0_76 = arith.constant 0 : index
    %c0_77 = arith.constant 0 : index
    %128 = vector.load %arg9[%c0_76, %c0_77] : memref<1x32xf32, #tpu.memory_space<vmem>>, vector<1x32xf32>
    %129 = vector.broadcast %128 : vector<1x32xf32> to vector<8x32xf32>
    %130 = arith.mulf %127, %129 : vector<8x32xf32>
    %c0_78 = arith.constant 0 : index
    %c0_79 = arith.constant 0 : index
    %131 = vector.load %arg10[%c0_78, %c0_79] : memref<1x32xf32, #tpu.memory_space<vmem>>, vector<1x32xf32>
    %132 = vector.broadcast %131 : vector<1x32xf32> to vector<8x32xf32>
    %133 = arith.addf %130, %132 : vector<8x32xf32>
    %134 = arith.truncf %133 : vector<8x32xf32> to vector<8x32xbf16>
    %c0_80 = arith.constant 0 : index
    %c0_81 = arith.constant 0 : index
    %c0_82 = arith.constant 0 : index
    %135 = vector.load %arg11[%c0_80, %c0_81, %c0_82] : memref<1x8x32xbf16, #tpu.memory_space<vmem>>, vector<1x8x32xbf16>
    %136 = vector.shape_cast %135 : vector<1x8x32xbf16> to vector<8x32xbf16>
    %137 = vector.shape_cast %134 : vector<8x32xbf16> to vector<1x8x32xbf16>
    tpu.vector_store %arg11[%c0_80, %c0_81, %c0_82], %137 {strides = array<i32>} : memref<1x8x32xbf16, #tpu.memory_space<vmem>>, vector<1x8x32xbf16>,
    return
  }
  func.func @transform_0(%arg0: i32, %arg1: i32) -> (i32, i32, i32) {
    %c0_i32 = arith.constant 0 : i32
    %c0_i32_0 = arith.constant 0 : i32
    return %arg0, %arg1, %c0_i32 : i32, i32, i32
  }
  func.func @transform_1(%arg0: i32, %arg1: i32) -> (i32, i32, i32) {
    %c0_i32 = arith.constant 0 : i32
    %c0_i32_0 = arith.constant 0 : i32
    %c0_i32_1 = arith.constant 0 : i32
    return %arg0, %c0_i32, %c0_i32_0 : i32, i32, i32
  }
  func.func @transform_2(%arg0: i32, %arg1: i32) -> (i32, i32, i32) {
    %c0_i32 = arith.constant 0 : i32
    %c0_i32_0 = arith.constant 0 : i32
    %c0_i32_1 = arith.constant 0 : i32
    return %c0_i32, %arg1, %c0_i32_0 : i32, i32, i32
  }
  func.func @transform_3(%arg0: i32, %arg1: i32) -> (i32, i32) {
    %c0_i32 = arith.constant 0 : i32
    %c0_i32_0 = arith.constant 0 : i32
    %c0_i32_1 = arith.constant 0 : i32
    return %c0_i32, %c0_i32_0 : i32, i32
  }
  func.func @transform_4(%arg0: i32, %arg1: i32) -> (i32, i32) {
    %c0_i32 = arith.constant 0 : i32
    %c0_i32_0 = arith.constant 0 : i32
    %c0_i32_1 = arith.constant 0 : i32
    return %c0_i32, %c0_i32_0 : i32, i32
  }
  func.func @transform_5(%arg0: i32, %arg1: i32) -> (i32, i32) {
    %c0_i32 = arith.constant 0 : i32
    %c0_i32_0 = arith.constant 0 : i32
    %c0_i32_1 = arith.constant 0 : i32
    return %c0_i32, %c0_i32_0 : i32, i32
  }
  func.func @transform_6(%arg0: i32, %arg1: i32) -> (i32, i32) {
    %c0_i32 = arith.constant 0 : i32
    %c0_i32_0 = arith.constant 0 : i32
    %c0_i32_1 = arith.constant 0 : i32
    return %c0_i32, %c0_i32_0 : i32, i32
  }
  func.func @transform_7(%arg0: i32, %arg1: i32) -> (i32, i32) {
    %c0_i32 = arith.constant 0 : i32
    %c0_i32_0 = arith.constant 0 : i32
    %c0_i32_1 = arith.constant 0 : i32
    return %c0_i32, %c0_i32_0 : i32, i32
  }
  func.func @transform_8(%arg0: i32, %arg1: i32) -> (i32, i32) {
    %c0_i32 = arith.constant 0 : i32
    %c0_i32_0 = arith.constant 0 : i32
    %c0_i32_1 = arith.constant 0 : i32
    return %c0_i32, %c0_i32_0 : i32, i32
  }
  func.func @transform_9(%arg0: i32, %arg1: i32) -> (i32, i32, i32) {
    %c0_i32 = arith.constant 0 : i32
    %c0_i32_0 = arith.constant 0 : i32
    return %arg0, %arg1, %c0_i32 : i32, i32, i32
  }
}

</mosaic_0001>

<llo_original>
// kernel: tpu_custom_call.1
$region0: #{tpu_custom_call.1}
  #allocation0 [shape = 'u32[]', space=smem, size = 0x4, offset = 0x4, fixed_abs, tag = 'smem constant byte address 0x4 - core index']
  #allocation1 [shape = 'u32[72,128]{1,0:T(1,128)}', space=vmem, size = 0x9000, scoped, tag = 'internal scratch']
  #allocation2 [shape = 'bf16[8,32]{1,0:T(8,128)(2,1)}', space=vmem, size = 0x800, scoped, tag = 'scratch operand']
  #allocation3 [shape = 'bf16[8,32]{1,0:T(8,128)(2,1)}', space=vmem, size = 0x800, scoped, tag = 'scratch operand']
  #allocation4 [shape = 'bf16[8,32]{1,0:T(8,128)(2,1)}', space=vmem, size = 0x800, scoped, tag = 'scratch operand']
  #allocation5 [shape = 'bf16[8,32]{1,0:T(8,128)(2,1)}', space=vmem, size = 0x800, scoped, tag = 'scratch operand']
  %s0 = inlined_call_operand.hbm [shape: bf16[2,8,32], index: 0, kind: input, shape index: {}]
  %s1 = inlined_call_operand.hbm [shape: bf16[2,8,32], index: 1, kind: input, shape index: {}]
  %s2 = inlined_call_operand.hbm [shape: f32[1,8,8], index: 2, kind: input, shape index: {}]
  %s3 = inlined_call_operand.hbm [shape: bf16[32,96], index: 3, kind: input, shape index: {}]
  %s4 = inlined_call_operand.vmem [shape: f32[1,96], index: 4, kind: input, shape index: {}]
  %s5 = inlined_call_operand.hbm [shape: bf16[32,32], index: 5, kind: input, shape index: {}]
  %s6 = inlined_call_operand.vmem [shape: f32[1,32], index: 6, kind: input, shape index: {}]
  %s7 = inlined_call_operand.vmem [shape: f32[1,32], index: 7, kind: input, shape index: {}]
  %s8 = inlined_call_operand.vmem [shape: f32[1,32], index: 8, kind: input, shape index: {}]
  %s9 = inlined_call_operand.hbm [shape: bf16[2,8,32], index: 9, kind: output, shape index: {}]
  %s10 = sld [smem:[#allocation0]]
  $region89: #{tpu_custom_call.1} parent=0
    _
  %s12 = ssub.s32 1, %s10
  %s13 = scalar_select 0, %s12, %s10
  $region1: #{tpu_custom_call.1} parent=0
    #allocation6 [shape = 'u8[4096]{0}', space=vmem, size = 0x1000, scoped, tag = 'input window, operand 0']
    #allocation7 [shape = 's32[2]{0}', space=sflag, size = 0x8, scoped, tag = 'scoped memory for tpu_custom_call.1']
    #allocation8 [shape = 's32[2]{0}', space=sflag, size = 0x8, scoped, tag = 'scoped memory for tpu_custom_call.1']
    #allocation9 [shape = 'u8[4096]{0}', space=vmem, size = 0x1000, scoped, tag = 'input window, operand 1']
    #allocation10 [shape = 's32[2]{0}', space=sflag, size = 0x8, scoped, tag = 'scoped memory for tpu_custom_call.1']
    #allocation11 [shape = 'u8[4096]{0}', space=vmem, size = 0x1000, scoped, tag = 'input window, operand 2, single buffered']
    #allocation12 [shape = 'u8[8192]{0}', space=vmem, size = 0x2000, scoped, tag = 'input window, operand 3, single buffered']
    #allocation13 [shape = 's32[1]{0}', space=sflag, size = 0x4, scoped, tag = 'scoped memory for tpu_custom_call.1']
    #allocation14 [shape = 'u8[8192]{0}', space=vmem, size = 0x2000, scoped, tag = 'input window, operand 5, single buffered']
    #allocation15 [shape = 'u8[4096]{0}', space=vmem, size = 0x1000, scoped, tag = 'output window, operand 0']
    %14 = vsyncpa [#allocation7], 0
    %s15 = scalar_lea.sflag [#allocation7], 1
    %16 = vsyncpa %s15, 0
    %17 = vsyncpa [#allocation10], 0
    %s18 = scalar_lea.sflag [#allocation10], 1
    %19 = vsyncpa %s18, 0
    %20 = vsyncpa [#allocation13], 0
    %21 = vsyncpa [#allocation8], 0
    %s22 = scalar_lea.sflag [#allocation8], 1
    %23 = vsyncpa %s22, 0
    loop: start=0, step=1, limit=4
    $region2: #{tpu_custom_call.1} parent=1 // loop_pre_header
      _
    $region3: #{tpu_custom_call.1} parent=1 // loop_header
      %s25 = sphi 0, %s29
      %p26 = scmp.ge.s32.totalorder %s25, 4
      %s32 = sphi 0, %s44
      %s33 = sphi 0, %s40
      %s34 = sphi 0, %s32
      %s35 = sphi 0, %s33
      %s36 = sphi 0, %s34
      %s37 = sphi 0, %s35
      %s49 = sphi 0, %s51
      %s52 = sphi 0, %s49
      %s53 = sphi 0, %s52
      %s69 = sphi 0, %s53
      %s75 = sphi 0, %s77
      %s78 = sphi 0, %s75
      %s79 = sphi 0, %s78
      %s95 = sphi 0, %s79
      %s101 = sphi 0, %s103
      %s104 = sphi 0, %s101
      %s105 = sphi 0, %s104
      %s121 = sphi 0, %s105
      %s125 = sphi 0, %s125
      %s127 = sphi 0, %s125
      %s128 = sphi 0, %s127
      %s142 = sphi 0, %s128
      %s146 = sphi 0, %s146
      %s148 = sphi 0, %s146
      %s149 = sphi 0, %s148
      %s163 = sphi 0, %s149
      %s167 = sphi 0, %s167
      %s169 = sphi 0, %s167
      %s170 = sphi 0, %s169
      %s184 = sphi 0, %s170
      %s188 = sphi 0, %s188
      %s190 = sphi 0, %s188
      %s191 = sphi 0, %s190
      %s205 = sphi 0, %s191
      %s209 = sphi 0, %s209
      %s211 = sphi 0, %s209
      %s212 = sphi 0, %s211
      %s226 = sphi 0, %s212
      %s230 = sphi 0, %s230
      %s232 = sphi 0, %s230
      %s233 = sphi 0, %s232
      %s247 = sphi 0, %s233
      %s255 = sphi 0, %s257
      %s258 = sphi 0, %s255
      %s259 = sphi 0, %s258
      %s275 = sphi 0, %s259
    $region4: #{tpu_custom_call.1} parent=1 // loop_header_branch
      %28 = sbr.rel (%p26) target = $region8
    $region5: #{tpu_custom_call.1} parent=1 // loop_body
      %s30 = ssub.s32 %s25, 1
      %s31 = ssub.s32 %s25, 2
      %s38 = sadd.s32 1, %s33
      %p39 = scmp.ge.s32.totalorder %s38, 1
      %s40 = scalar_select %p39, 0, %s38
      %s41 = sadd.s32 1, %s32
      %s42 = scalar_select %p39, %s41, %s32
      %p43 = scmp.ge.s32.totalorder %s42, 2
      %s44 = scalar_select %p43, 0, %s42
      %s45 = ssub.s32 %s32, %s44
      %s46 = ssub.s32 %s33, %s40
      %s47 = sor.u32 %s45, %s46
      %p48 = scmp.eq.s32.totalorder %s47, 0
      %s50 = sadd.s32 %s49, 1
      %s51 = scalar_select %p48, %s49, %s50
      %p54 = pneg %p48
      %p55 = scmp.eq.s32.totalorder %s25, 1
      %p56 = por %p54, %p55
      %p57 = scmp.ne.s32.totalorder %s49, %s52
      %p58 = scmp.eq.s32.totalorder %s25, 0
      %p59 = por %p57, %p58
      %p60 = scmp.ne.s32.totalorder %s49, %s52
      %p61 = scmp.eq.s32.totalorder %s30, 1
      %p62 = por %p60, %p61
      %p63 = scmp.ne.s32.totalorder %s52, %s53
      %p64 = scmp.eq.s32.totalorder %s30, 0
      %p65 = por %p63, %p64
      %p66 = scmp.ne.s32.totalorder %s52, %s53
      %p67 = scmp.eq.s32.totalorder %s31, 1
      %p68 = por %p66, %p67
      %p70 = scmp.ne.s32.totalorder %s53, %s69
      %p71 = scmp.eq.s32.totalorder %s31, 0
      %p72 = por %p70, %p71
      %s73 = ssub.s32 %s32, %s44
      %p74 = scmp.eq.s32.totalorder %s73, 0
      %s76 = sadd.s32 %s75, 1
      %s77 = scalar_select %p74, %s75, %s76
      %p80 = pneg %p74
      %p81 = scmp.eq.s32.totalorder %s25, 1
      %p82 = por %p80, %p81
      %p83 = scmp.ne.s32.totalorder %s75, %s78
      %p84 = scmp.eq.s32.totalorder %s25, 0
      %p85 = por %p83, %p84
      %p86 = scmp.ne.s32.totalorder %s75, %s78
      %p87 = scmp.eq.s32.totalorder %s30, 1
      %p88 = por %p86, %p87
      %p89 = scmp.ne.s32.totalorder %s78, %s79
      %p90 = scmp.eq.s32.totalorder %s30, 0
      %p91 = por %p89, %p90
      %p92 = scmp.ne.s32.totalorder %s78, %s79
      %p93 = scmp.eq.s32.totalorder %s31, 1
      %p94 = por %p92, %p93
      %p96 = scmp.ne.s32.totalorder %s79, %s95
      %p97 = scmp.eq.s32.totalorder %s31, 0
      %p98 = por %p96, %p97
      %s99 = ssub.s32 %s33, %s40
      %p100 = scmp.eq.s32.totalorder %s99, 0
      %s102 = sadd.s32 %s101, 1
      %s103 = scalar_select %p100, %s101, %s102
      %p106 = pneg %p100
      %p107 = scmp.eq.s32.totalorder %s25, 1
      %p108 = por %p106, %p107
      %p109 = scmp.ne.s32.totalorder %s101, %s104
      %p110 = scmp.eq.s32.totalorder %s25, 0
      %p111 = por %p109, %p110
      %p112 = scmp.ne.s32.totalorder %s101, %s104
      %p113 = scmp.eq.s32.totalorder %s30, 1
      %p114 = por %p112, %p113
      %p115 = scmp.ne.s32.totalorder %s104, %s105
      %p116 = scmp.eq.s32.totalorder %s30, 0
      %p117 = por %p115, %p116
      %p118 = scmp.ne.s32.totalorder %s104, %s105
      %p119 = scmp.eq.s32.totalorder %s31, 1
      %p120 = por %p118, %p119
      %p122 = scmp.ne.s32.totalorder %s105, %s121
      %p123 = scmp.eq.s32.totalorder %s31, 0
      %p124 = por %p122, %p123
      %s126 = sadd.s32 %s125, 1
      %p129 = scmp.eq.s32.totalorder %s25, 1
      %p130 = scmp.ne.s32.totalorder %s125, %s127
      %p131 = scmp.eq.s32.totalorder %s25, 0
      %p132 = por %p130, %p131
      %p133 = scmp.ne.s32.totalorder %s125, %s127
      %p134 = scmp.eq.s32.totalorder %s30, 1
      %p135 = por %p133, %p134
      %p136 = scmp.ne.s32.totalorder %s127, %s128
      %p137 = scmp.eq.s32.totalorder %s30, 0
      %p138 = por %p136, %p137
      %p139 = scmp.ne.s32.totalorder %s127, %s128
      %p140 = scmp.eq.s32.totalorder %s31, 1
      %p141 = por %p139, %p140
      %p143 = scmp.ne.s32.totalorder %s128, %s142
      %p144 = scmp.eq.s32.totalorder %s31, 0
      %p145 = por %p143, %p144
      %s147 = sadd.s32 %s146, 1
      %p150 = scmp.eq.s32.totalorder %s25, 1
      %p151 = scmp.ne.s32.totalorder %s146, %s148
      %p152 = scmp.eq.s32.totalorder %s25, 0
      %p153 = por %p151, %p152
      %p154 = scmp.ne.s32.totalorder %s146, %s148
      %p155 = scmp.eq.s32.totalorder %s30, 1
      %p156 = por %p154, %p155
      %p157 = scmp.ne.s32.totalorder %s148, %s149
      %p158 = scmp.eq.s32.totalorder %s30, 0
      %p159 = por %p157, %p158
      %p160 = scmp.ne.s32.totalorder %s148, %s149
      %p161 = scmp.eq.s32.totalorder %s31, 1
      %p162 = por %p160, %p161
      %p164 = scmp.ne.s32.totalorder %s149, %s163
      %p165 = scmp.eq.s32.totalorder %s31, 0
      %p166 = por %p164, %p165
      %s168 = sadd.s32 %s167, 1
      %p171 = scmp.eq.s32.totalorder %s25, 1
      %p172 = scmp.ne.s32.totalorder %s167, %s169
      %p173 = scmp.eq.s32.totalorder %s25, 0
      %p174 = por %p172, %p173
      %p175 = scmp.ne.s32.totalorder %s167, %s169
      %p176 = scmp.eq.s32.totalorder %s30, 1
      %p177 = por %p175, %p176
      %p178 = scmp.ne.s32.totalorder %s169, %s170
      %p179 = scmp.eq.s32.totalorder %s30, 0
      %p180 = por %p178, %p179
      %p181 = scmp.ne.s32.totalorder %s169, %s170
      %p182 = scmp.eq.s32.totalorder %s31, 1
      %p183 = por %p181, %p182
      %p185 = scmp.ne.s32.totalorder %s170, %s184
      %p186 = scmp.eq.s32.totalorder %s31, 0
      %p187 = por %p185, %p186
      %s189 = sadd.s32 %s188, 1
      %p192 = scmp.eq.s32.totalorder %s25, 1
      %p193 = scmp.ne.s32.totalorder %s188, %s190
      %p194 = scmp.eq.s32.totalorder %s25, 0
      %p195 = por %p193, %p194
      %p196 = scmp.ne.s32.totalorder %s188, %s190
      %p197 = scmp.eq.s32.totalorder %s30, 1
      %p198 = por %p196, %p197
      %p199 = scmp.ne.s32.totalorder %s190, %s191
      %p200 = scmp.eq.s32.totalorder %s30, 0
      %p201 = por %p199, %p200
      %p202 = scmp.ne.s32.totalorder %s190, %s191
      %p203 = scmp.eq.s32.totalorder %s31, 1
      %p204 = por %p202, %p203
      %p206 = scmp.ne.s32.totalorder %s191, %s205
      %p207 = scmp.eq.s32.totalorder %s31, 0
      %p208 = por %p206, %p207
      %s210 = sadd.s32 %s209, 1
      %p213 = scmp.eq.s32.totalorder %s25, 1
      %p214 = scmp.ne.s32.totalorder %s209, %s211
      %p215 = scmp.eq.s32.totalorder %s25, 0
      %p216 = por %p214, %p215
      %p217 = scmp.ne.s32.totalorder %s209, %s211
      %p218 = scmp.eq.s32.totalorder %s30, 1
      %p219 = por %p217, %p218
      %p220 = scmp.ne.s32.totalorder %s211, %s212
      %p221 = scmp.eq.s32.totalorder %s30, 0
      %p222 = por %p220, %p221
      %p223 = scmp.ne.s32.totalorder %s211, %s212
      %p224 = scmp.eq.s32.totalorder %s31, 1
      %p225 = por %p223, %p224
      %p227 = scmp.ne.s32.totalorder %s212, %s226
      %p228 = scmp.eq.s32.totalorder %s31, 0
      %p229 = por %p227, %p228
      %s231 = sadd.s32 %s230, 1
      %p234 = scmp.eq.s32.totalorder %s25, 1
      %p235 = scmp.ne.s32.totalorder %s230, %s232
      %p236 = scmp.eq.s32.totalorder %s25, 0
      %p237 = por %p235, %p236
      %p238 = scmp.ne.s32.totalorder %s230, %s232
      %p239 = scmp.eq.s32.totalorder %s30, 1
      %p240 = por %p238, %p239
      %p241 = scmp.ne.s32.totalorder %s232, %s233
      %p242 = scmp.eq.s32.totalorder %s30, 0
      %p243 = por %p241, %p242
      %p244 = scmp.ne.s32.totalorder %s232, %s233
      %p245 = scmp.eq.s32.totalorder %s31, 1
      %p246 = por %p244, %p245
      %p248 = scmp.ne.s32.totalorder %s233, %s247
      %p249 = scmp.eq.s32.totalorder %s31, 0
      %p250 = por %p248, %p249
      %s251 = ssub.s32 %s32, %s44
      %s252 = ssub.s32 %s33, %s40
      %s253 = sor.u32 %s251, %s252
      %p254 = scmp.eq.s32.totalorder %s253, 0
      %s256 = sadd.s32 %s255, 1
      %s257 = scalar_select %p254, %s255, %s256
      %p260 = pneg %p254
      %p261 = scmp.eq.s32.totalorder %s25, 1
      %p262 = por %p260, %p261
      %p263 = scmp.ne.s32.totalorder %s255, %s258
      %p264 = scmp.eq.s32.totalorder %s25, 0
      %p265 = por %p263, %p264
      %p266 = scmp.ne.s32.totalorder %s255, %s258
      %p267 = scmp.eq.s32.totalorder %s30, 1
      %p268 = por %p266, %p267
      %p269 = scmp.ne.s32.totalorder %s258, %s259
      %p270 = scmp.eq.s32.totalorder %s30, 0
      %p271 = por %p269, %p270
      %p272 = scmp.ne.s32.totalorder %s258, %s259
      %p273 = scmp.eq.s32.totalorder %s31, 1
      %p274 = por %p272, %p273
      %p276 = scmp.ne.s32.totalorder %s259, %s275
      %p277 = scmp.eq.s32.totalorder %s31, 0
      %p278 = por %p276, %p277
      %p279 = scmp.le.s32.totalorder 1, %s25
      %p280 = scmp.lt.s32.totalorder %s25, 3
      %p281 = pnand %p279, %p280
      %p282 = pneg %p281
      // Predicated region
      $region9: #{tpu_custom_call.1} parent=5 // pred_check
        _
      $region10: #{tpu_custom_call.1} parent=5 // pred_check_branch
        %284 = sbr.rel (%p281) target = $region12
      $region11: #{tpu_custom_call.1} parent=5 // pred_region
        %s285 = ssub.s32 %s25, 1
        // Predicated region
        $region13: #{tpu_custom_call.1} parent=11 // pred_check
          %p286 = pneg %p117
        $region14: #{tpu_custom_call.1} parent=11 // pred_check_branch
          %288 = sbr.rel (%p286) target = $region16
        $region15: #{tpu_custom_call.1} parent=11 // pred_region
          %290 = vsyncadd [#allocation10], 0
          %s291 = smul.addr %s35, 8
          %s292 = scalar_lea.hbm %s2, %s291
          %s294 = sshll.u32 %s292, 4
          %s295 = int_to_ptr.hbm [resolvable:$true] %s294
          %s296 = sshll.u32 [#allocation11], 4
          %s297 = int_to_ptr.vmem [resolvable:$true] %s296
          %299 = dma.hbm_to_vmem [thread:$0]  %s295, 128, %s297, [#allocation10]
        $region16: #{tpu_custom_call.1} parent=11 // pred_fallthru
          _
        // Predicated region
        $region17: #{tpu_custom_call.1} parent=11 // pred_check
          %p300 = pneg %p138
        $region18: #{tpu_custom_call.1} parent=11 // pred_check_branch
          %302 = sbr.rel (%p300) target = $region20
        $region19: #{tpu_custom_call.1} parent=11 // pred_region
          %304 = vsyncadd [#allocation13], 0
          %s305 = sshll.u32 %s3, 4
          %s306 = int_to_ptr.hbm [resolvable:$true] %s305
          %s307 = sshll.u32 [#allocation12], 4
          %s308 = int_to_ptr.vmem [resolvable:$true] %s307
          %313 = dma.hbm_to_vmem [thread:$0]  %s306, 256, %s308, [#allocation13], 64, 64, 4
        $region20: #{tpu_custom_call.1} parent=11 // pred_fallthru
          _
        // Predicated region
        $region21: #{tpu_custom_call.1} parent=11 // pred_check
          %p314 = pneg %p159
        $region22: #{tpu_custom_call.1} parent=11 // pred_check_branch
          %316 = sbr.rel (%p314) target = $region24
        $region23: #{tpu_custom_call.1} parent=11 // pred_region
          _
        $region24: #{tpu_custom_call.1} parent=11 // pred_fallthru
          _
        // Predicated region
        $region25: #{tpu_custom_call.1} parent=11 // pred_check
          %p317 = pneg %p180
        $region26: #{tpu_custom_call.1} parent=11 // pred_check_branch
          %319 = sbr.rel (%p317) target = $region28
        $region27: #{tpu_custom_call.1} parent=11 // pred_region
          %321 = vsyncadd [#allocation13], 0
          %s322 = sshll.u32 %s5, 4
          %s323 = int_to_ptr.hbm [resolvable:$true] %s322
          %s324 = sshll.u32 [#allocation14], 4
          %s325 = int_to_ptr.vmem [resolvable:$true] %s324
          %330 = dma.hbm_to_vmem [thread:$0]  %s323, 256, %s325, [#allocation13], 64, 64, 4
        $region28: #{tpu_custom_call.1} parent=11 // pred_fallthru
          _
        // Predicated region
        $region29: #{tpu_custom_call.1} parent=11 // pred_check
          %p331 = pneg %p201
        $region30: #{tpu_custom_call.1} parent=11 // pred_check_branch
          %333 = sbr.rel (%p331) target = $region32
        $region31: #{tpu_custom_call.1} parent=11 // pred_region
          _
        $region32: #{tpu_custom_call.1} parent=11 // pred_fallthru
          _
        // Predicated region
        $region33: #{tpu_custom_call.1} parent=11 // pred_check
          %p334 = pneg %p222
        $region34: #{tpu_custom_call.1} parent=11 // pred_check_branch
          %336 = sbr.rel (%p334) target = $region36
        $region35: #{tpu_custom_call.1} parent=11 // pred_region
          _
        $region36: #{tpu_custom_call.1} parent=11 // pred_fallthru
          _
        // Predicated region
        $region37: #{tpu_custom_call.1} parent=11 // pred_check
          %p337 = pneg %p243
        $region38: #{tpu_custom_call.1} parent=11 // pred_check_branch
          %339 = sbr.rel (%p337) target = $region40
        $region39: #{tpu_custom_call.1} parent=11 // pred_region
          _
        $region40: #{tpu_custom_call.1} parent=11 // pred_fallthru
          _
      $region12: #{tpu_custom_call.1} parent=5 // pred_fallthru
        _
      %p340 = scmp.lt.s32.totalorder %s25, 2
      // Predicated region
      $region41: #{tpu_custom_call.1} parent=5 // pred_check
        %p341 = pneg %p340
      $region42: #{tpu_custom_call.1} parent=5 // pred_check_branch
        %343 = sbr.rel (%p341) target = $region44
      $region43: #{tpu_custom_call.1} parent=5 // pred_region
        // Predicated region
        $region45: #{tpu_custom_call.1} parent=43 // pred_check
          %p344 = pneg %p59
        $region46: #{tpu_custom_call.1} parent=43 // pred_check_branch
          %346 = sbr.rel (%p344) target = $region48
        $region47: #{tpu_custom_call.1} parent=43 // pred_region
          %s347 = sand.u32 %s49, 1
          %s348 = scalar_lea.sflag [#allocation7], %s347
          %s349 = sand.u32 %s49, 1
          %s350 = smul.addr %s349, 4
          %s351 = scalar_lea.vmem [#allocation6], %s350
          %353 = vsyncadd %s348, 0
          %s354 = sadd.s32 %s33, %s32
          %s355 = smul.addr %s354, 4
          %s356 = scalar_lea.hbm %s0, %s355
          %s358 = sshll.u32 %s356, 4
          %s359 = int_to_ptr.hbm [resolvable:$true] %s358
          %s360 = sshll.u32 %s351, 4
          %s361 = int_to_ptr.vmem [resolvable:$true] %s360
          %363 = dma.hbm_to_vmem [thread:$0]  %s359, 64, %s361, %s348
        $region48: #{tpu_custom_call.1} parent=43 // pred_fallthru
          _
        // Predicated region
        $region49: #{tpu_custom_call.1} parent=43 // pred_check
          %p364 = pneg %p85
        $region50: #{tpu_custom_call.1} parent=43 // pred_check_branch
          %366 = sbr.rel (%p364) target = $region52
        $region51: #{tpu_custom_call.1} parent=43 // pred_region
          %s367 = sand.u32 %s25, 1
          %s368 = scalar_lea.sflag [#allocation10], %s367
          %s369 = sand.u32 %s75, 1
          %s370 = smul.addr %s369, 4
          %s371 = scalar_lea.vmem [#allocation9], %s370
          %373 = vsyncadd %s368, 0
          %s374 = smul.addr %s32, 4
          %s375 = scalar_lea.hbm %s1, %s374
          %s377 = sshll.u32 %s375, 4
          %s378 = int_to_ptr.hbm [resolvable:$true] %s377
          %s379 = sshll.u32 %s371, 4
          %s380 = int_to_ptr.vmem [resolvable:$true] %s379
          %382 = dma.hbm_to_vmem [thread:$0]  %s378, 64, %s380, %s368
        $region52: #{tpu_custom_call.1} parent=43 // pred_fallthru
          _
      $region44: #{tpu_custom_call.1} parent=5 // pred_fallthru
        _
      %p383 = scmp.le.s32.totalorder 1, %s25
      %p384 = scmp.lt.s32.totalorder %s25, 3
      %p385 = pnand %p383, %p384
      %p386 = pneg %p385
      // Predicated region
      $region53: #{tpu_custom_call.1} parent=5 // pred_check
        _
      $region54: #{tpu_custom_call.1} parent=5 // pred_check_branch
        %388 = sbr.rel (%p385) target = $region56
      $region55: #{tpu_custom_call.1} parent=5 // pred_region
        %s389 = ssub.s32 %s25, 1
        %s390 = sand.u32 %s52, 1
        %s391 = scalar_lea.sflag [#allocation7], %s390
        %s392 = sand.u32 %s52, 1
        %s393 = smul.addr %s392, 4
        %s394 = scalar_lea.vmem [#allocation6], %s393
        // Predicated region
        $region57: #{tpu_custom_call.1} parent=55 // pred_check
          %p395 = pneg %p65
        $region58: #{tpu_custom_call.1} parent=55 // pred_check_branch
          %397 = sbr.rel (%p395) target = $region60
        $region59: #{tpu_custom_call.1} parent=55 // pred_region
          %399 = dma.done %s391, 64
        $region60: #{tpu_custom_call.1} parent=55 // pred_fallthru
          _
        %s400 = sand.u32 %s30, 1
        %s401 = scalar_lea.sflag [#allocation10], %s400
        %s402 = sand.u32 %s78, 1
        %s403 = smul.addr %s402, 4
        %s404 = scalar_lea.vmem [#allocation9], %s403
        // Predicated region
        $region61: #{tpu_custom_call.1} parent=55 // pred_check
          %p405 = pneg %p91
        $region62: #{tpu_custom_call.1} parent=55 // pred_check_branch
          %407 = sbr.rel (%p405) target = $region64
        $region63: #{tpu_custom_call.1} parent=55 // pred_region
          %409 = dma.done %s401, 64
        $region64: #{tpu_custom_call.1} parent=55 // pred_fallthru
          _
        // Predicated region
        $region65: #{tpu_custom_call.1} parent=55 // pred_check
          %p410 = pneg %p117
        $region66: #{tpu_custom_call.1} parent=55 // pred_check_branch
          %412 = sbr.rel (%p410) target = $region68
        $region67: #{tpu_custom_call.1} parent=55 // pred_region
          %414 = dma.done [#allocation10], 128
        $region68: #{tpu_custom_call.1} parent=55 // pred_fallthru
          _
        // Predicated region
        $region69: #{tpu_custom_call.1} parent=55 // pred_check
          %p415 = pneg %p138
        $region70: #{tpu_custom_call.1} parent=55 // pred_check_branch
          %417 = sbr.rel (%p415) target = $region72
        $region71: #{tpu_custom_call.1} parent=55 // pred_region
          %419 = dma.done [#allocation13], 256
        $region72: #{tpu_custom_call.1} parent=55 // pred_fallthru
          _
        // Predicated region
        $region73: #{tpu_custom_call.1} parent=55 // pred_check
          %p420 = pneg %p180
        $region74: #{tpu_custom_call.1} parent=55 // pred_check_branch
          %422 = sbr.rel (%p420) target = $region76
        $region75: #{tpu_custom_call.1} parent=55 // pred_region
          %424 = dma.done [#allocation13], 256
        $region76: #{tpu_custom_call.1} parent=55 // pred_fallthru
          _
        %s425 = sand.u32 %s52, 1
        %s426 = scalar_lea.sflag [#allocation7], %s425
        %s427 = sand.u32 %s52, 1
        %s428 = smul.addr %s427, 4
        %s429 = scalar_lea.vmem [#allocation6], %s428
        %p430 = pneg %p65
        %p431 = pneg %p62
        %s432 = sand.u32 %s30, 1
        %s433 = scalar_lea.sflag [#allocation10], %s432
        %s434 = sand.u32 %s78, 1
        %s435 = smul.addr %s434, 4
        %s436 = scalar_lea.vmem [#allocation9], %s435
        %p437 = pneg %p91
        %p438 = pneg %p88
        %p439 = pneg %p117
        %p440 = pneg %p114
        %p441 = pneg %p138
        %p442 = pneg %p135
        %p443 = pneg %p159
        %p444 = pneg %p156
        %p445 = pneg %p180
        %p446 = pneg %p177
        %p447 = pneg %p201
        %p448 = pneg %p198
        %p449 = pneg %p222
        %p450 = pneg %p219
        %p451 = pneg %p243
        %p452 = pneg %p240
        %p453 = pneg %p271
        %p454 = pneg %p268
        %s455 = sand.u32 %s258, 1
        %s456 = scalar_lea.sflag [#allocation8], %s455
        %s457 = sand.u32 %s258, 1
        %s458 = smul.addr %s457, 4
        %s459 = scalar_lea.vmem [#allocation15], %s458
        %v461 = vld [vmem:[%s394] sm:$0xf]
        %v462 = vld [vmem:[#allocation12] sm:$0xf]
        %v463 = vld [vmem:[#allocation12 + $0x4] sm:$0xf]
        %v464 = vld [vmem:[#allocation12 + $0x8] sm:$0xf]
        %v465 = vld [vmem:[#allocation12 + $0xc] sm:$0xf]
        %v466 = vld [vmem:[%s4] sm:$0x1]
        %v468 = vperm.slane %v466, 0
        %v474 = vunpack.c.l.b16 %v462
        %v475 = vunpack.c.l.b16 %v463
        %v476 = vunpack.c.l.b16 %v464
        %v477 = vunpack.c.l.b16 %v465
        %v478 = vpack.c.b16 %v475, %v474
        %v479 = vpack.c.b16 %v477, %v476
        %vm482 = vcmask 261120
        %v484 = vsel %vm482, %v461, 0
        %486 = vmatpush.bf16.msra.mxu0 0
        %487 = vmatpush.bf16.msra.mxu0 0
        %488 = vmatpush.bf16.msra.mxu0 0
        %489 = vmatpush.bf16.msra.mxu0 0
        %490 = vmatpush.bf16.msra.mxu0 0
        %491 = vmatpush.bf16.msra.mxu0 0
        %492 = vmatpush.bf16.msra.mxu0 %v479
        %493 = vmatpush.bf16.msra.mxu0 %v478
        %494 = vmatmul.bf16.gmra.mxu0 %v484
        %v495 = vpop.f32.mrf.mxu0
        %v496 = vadd.f32 %v468, %v495
        %v497 = vpop.f32.mrf.mxu0
        %498 = vdwg.mxu0
        %v499 = vpack.c.bf16 %v496, %v496
        %vm500 = vcmask 257024
        %501 = vst.msk [vmem:[#allocation2] sm:$0xf] %vm500, %v499
        %503 = vrot.lane.b32.xlu0 %v499, 96
        %v504 = vpop.permute.xlu0 %503
        %506 = vst.msk [vmem:[#allocation3] sm:$0xf] %vm500, %v504
        %507 = vrot.lane.b32.xlu0 %v499, 64
        %v508 = vpop.permute.xlu0 %507
        %510 = vst.msk [vmem:[#allocation4] sm:$0xf] %vm500, %v508
        %v511 = vld [vmem:[#allocation11] sm:$0xff]
        %v512 = vld [vmem:[#allocation2] sm:$0xf]
        %v513 = vld [vmem:[#allocation3] sm:$0xf]
        %v514 = vld [vmem:[#allocation4] sm:$0xf]
        %vm515 = vcmask 64512
        %v517 = vsel %vm515, %v512, 0
        %v520 = vsel %vm515, %v513, 0
        %522 = vmatpush.bf16.xpose.msra.mxu0 0
        %523 = vmatpush.bf16.xpose.msra.mxu0 0
        %524 = vmatpush.bf16.xpose.msra.mxu0 0
        %525 = vmatpush.bf16.xpose.msra.mxu0 0
        %526 = vmatpush.bf16.xpose.msra.mxu0 0
        %527 = vmatpush.bf16.xpose.msra.mxu0 0
        %528 = vmatpush.bf16.xpose.msra.mxu0 0
        %529 = vmatpush.bf16.xpose.msra.mxu0 %v520
        %530 = vmatmul.bf16.gmra.mxu0 %v517
        %v531 = vpop.f32.mrf.mxu0
        %v532 = vadd.f32 0.0, %v531
        %v533 = vpop.f32.mrf.mxu0
        %534 = vdwg.mxu0
        %v535 = vmul.f32 %v532, 0.35355338
        %v536 = vadd.f32 %v535, %v511
        %v537 = vsel %vm515, %v536, -inf
        %538 = vmax.xlane.f32.xlu0 %v537
        %v539 = vpop.xlane.xlu0 %538
        %v540 = vsub.f32 %v536, %v539
        %v541 = vmul.f32 %v540, 1.442695
        %v542 = vpow.pop %v541
        %v543 = vsel %vm515, %v542, 0.0
        %544 = vadd.xlane.f32.xlu0 %v543
        %v545 = vpop.xlane.xlu0 %544
        %v546 = vrcp.pop %v545
        %v547 = vmul.f32 %v542, %v546
        %v548 = vpack.c.bf16 %v547, %v547
        %v550 = vsel %vm515, %v548, 0
        %vm552 = vcmask 1043456
        %v554 = vsel %vm552, %v514, 0
        %556 = vmatpush.bf16.msra.mxu0 0
        %557 = vmatpush.bf16.msra.mxu0 0
        %558 = vmatpush.bf16.msra.mxu0 0
        %559 = vmatpush.bf16.msra.mxu0 0
        %560 = vmatpush.bf16.msra.mxu0 0
        %561 = vmatpush.bf16.msra.mxu0 0
        %562 = vmatpush.bf16.msra.mxu0 0
        %563 = vmatpush.bf16.msra.mxu0 %v554
        %564 = vmatmul.bf16.gmra.mxu0 %v550
        %v565 = vpop.f32.mrf.mxu0
        %v566 = vadd.f32 0.0, %v565
        %v567 = vpop.f32.mrf.mxu0
        %568 = vdwg.mxu0
        %v569 = vpack.c.bf16 %v566, %v566
        %vm570 = vcmask 60416
        %571 = vst.msk [vmem:[#allocation5] sm:$0xf] %vm570, %v569
        %v572 = vld [vmem:[#allocation2] sm:$0xf]
        %v573 = vld [vmem:[#allocation3] sm:$0xf]
        %v574 = vld [vmem:[#allocation4] sm:$0xf]
        %v576 = vunpack.c.l.b16 %v572
        %v577 = vpack.c.b16 %v576, %v576
        %578 = vrot.lane.b32.xlu0 %v577, 120
        %v579 = vpop.permute.xlu0 %578
        %v581 = vunpack.c.l.b16 %v573
        %v582 = vpack.c.b16 %v581, %v581
        %583 = vrot.lane.b32.xlu0 %v582, 120
        %v584 = vpop.permute.xlu0 %583
        %v586 = vsel %vm515, %v579, 0
        %v589 = vsel %vm515, %v584, 0
        %591 = vmatpush.bf16.xpose.msra.mxu0 0
        %592 = vmatpush.bf16.xpose.msra.mxu0 0
        %593 = vmatpush.bf16.xpose.msra.mxu0 0
        %594 = vmatpush.bf16.xpose.msra.mxu0 0
        %595 = vmatpush.bf16.xpose.msra.mxu0 0
        %596 = vmatpush.bf16.xpose.msra.mxu0 0
        %597 = vmatpush.bf16.xpose.msra.mxu0 0
        %598 = vmatpush.bf16.xpose.msra.mxu0 %v589
        %599 = vmatmul.bf16.gmra.mxu0 %v586
        %v600 = vpop.f32.mrf.mxu0
        %v601 = vadd.f32 0.0, %v600
        %v602 = vpop.f32.mrf.mxu0
        %603 = vdwg.mxu0
        %v604 = vmul.f32 %v601, 0.35355338
        %v605 = vadd.f32 %v604, %v511
        %v606 = vsel %vm515, %v605, -inf
        %607 = vmax.xlane.f32.xlu0 %v606
        %v608 = vpop.xlane.xlu0 %607
        %v609 = vsub.f32 %v605, %v608
        %v610 = vmul.f32 %v609, 1.442695
        %v611 = vpow.pop %v610
        %v612 = vsel %vm515, %v611, 0.0
        %613 = vadd.xlane.f32.xlu0 %v612
        %v614 = vpop.xlane.xlu0 %613
        %v615 = vrcp.pop %v614
        %v616 = vmul.f32 %v611, %v615
        %v617 = vpack.c.bf16 %v616, %v616
        %v619 = vunpack.c.l.b16 %v574
        %v620 = vpack.c.b16 %v619, %v619
        %621 = vrot.lane.b32.xlu0 %v620, 120
        %v622 = vpop.permute.xlu0 %621
        %v624 = vsel %vm515, %v617, 0
        %v627 = vsel %vm552, %v622, 0
        %629 = vmatpush.bf16.msra.mxu0 0
        %630 = vmatpush.bf16.msra.mxu0 0
        %631 = vmatpush.bf16.msra.mxu0 0
        %632 = vmatpush.bf16.msra.mxu0 0
        %633 = vmatpush.bf16.msra.mxu0 0
        %634 = vmatpush.bf16.msra.mxu0 0
        %635 = vmatpush.bf16.msra.mxu0 0
        %636 = vmatpush.bf16.msra.mxu0 %v627
        %637 = vmatmul.bf16.gmra.mxu0 %v624
        %v638 = vpop.f32.mrf.mxu0
        %v639 = vadd.f32 0.0, %v638
        %v640 = vpop.f32.mrf.mxu0
        %641 = vdwg.mxu0
        %v642 = vpack.c.bf16 %v639, %v639
        %644 = vrot.lane.b32.xlu0 %v642, 8
        %v645 = vpop.permute.xlu0 %644
        %vm647 = vcmask 126016
        %648 = vst.msk [vmem:[#allocation5] sm:$0xf] %vm647, %v645
        %v649 = vld [vmem:[#allocation2] sm:$0xf]
        %v650 = vld [vmem:[#allocation3] sm:$0xf]
        %v651 = vld [vmem:[#allocation4] sm:$0xf]
        %v653 = vunpack.c.l.b16 %v649
        %v654 = vpack.c.b16 %v653, %v653
        %655 = vrot.lane.b32.xlu0 %v654, 112
        %v656 = vpop.permute.xlu0 %655
        %v658 = vunpack.c.l.b16 %v650
        %v659 = vpack.c.b16 %v658, %v658
        %660 = vrot.lane.b32.xlu0 %v659, 112
        %v661 = vpop.permute.xlu0 %660
        %v663 = vsel %vm515, %v656, 0
        %v666 = vsel %vm515, %v661, 0
        %668 = vmatpush.bf16.xpose.msra.mxu0 0
        %669 = vmatpush.bf16.xpose.msra.mxu0 0
        %670 = vmatpush.bf16.xpose.msra.mxu0 0
        %671 = vmatpush.bf16.xpose.msra.mxu0 0
        %672 = vmatpush.bf16.xpose.msra.mxu0 0
        %673 = vmatpush.bf16.xpose.msra.mxu0 0
        %674 = vmatpush.bf16.xpose.msra.mxu0 0
        %675 = vmatpush.bf16.xpose.msra.mxu0 %v666
        %676 = vmatmul.bf16.gmra.mxu0 %v663
        %v677 = vpop.f32.mrf.mxu0
        %v678 = vadd.f32 0.0, %v677
        %v679 = vpop.f32.mrf.mxu0
        %680 = vdwg.mxu0
        %v681 = vmul.f32 %v678, 0.35355338
        %v682 = vadd.f32 %v681, %v511
        %v683 = vsel %vm515, %v682, -inf
        %684 = vmax.xlane.f32.xlu0 %v683
        %v685 = vpop.xlane.xlu0 %684
        %v686 = vsub.f32 %v682, %v685
        %v687 = vmul.f32 %v686, 1.442695
        %v688 = vpow.pop %v687
        %v689 = vsel %vm515, %v688, 0.0
        %690 = vadd.xlane.f32.xlu0 %v689
        %v691 = vpop.xlane.xlu0 %690
        %v692 = vrcp.pop %v691
        %v693 = vmul.f32 %v688, %v692
        %v694 = vpack.c.bf16 %v693, %v693
        %v696 = vunpack.c.l.b16 %v651
        %v697 = vpack.c.b16 %v696, %v696
        %698 = vrot.lane.b32.xlu0 %v697, 112
        %v699 = vpop.permute.xlu0 %698
        %v701 = vsel %vm515, %v694, 0
        %v704 = vsel %vm552, %v699, 0
        %706 = vmatpush.bf16.msra.mxu0 0
        %707 = vmatpush.bf16.msra.mxu0 0
        %708 = vmatpush.bf16.msra.mxu0 0
        %709 = vmatpush.bf16.msra.mxu0 0
        %710 = vmatpush.bf16.msra.mxu0 0
        %711 = vmatpush.bf16.msra.mxu0 0
        %712 = vmatpush.bf16.msra.mxu0 0
        %713 = vmatpush.bf16.msra.mxu0 %v704
        %714 = vmatmul.bf16.gmra.mxu0 %v701
        %v715 = vpop.f32.mrf.mxu0
        %v716 = vadd.f32 0.0, %v715
        %v717 = vpop.f32.mrf.mxu0
        %718 = vdwg.mxu0
        %v719 = vpack.c.bf16 %v716, %v716
        %721 = vrot.lane.b32.xlu0 %v719, 16
        %v722 = vpop.permute.xlu0 %721
        %vm724 = vcmask 191616
        %725 = vst.msk [vmem:[#allocation5] sm:$0xf] %vm724, %v722
        %v726 = vld [vmem:[#allocation2] sm:$0xf]
        %v727 = vld [vmem:[#allocation3] sm:$0xf]
        %v728 = vld [vmem:[#allocation4] sm:$0xf]
        %v730 = vunpack.c.l.b16 %v726
        %v731 = vpack.c.b16 %v730, %v730
        %732 = vrot.lane.b32.xlu0 %v731, 104
        %v733 = vpop.permute.xlu0 %732
        %v735 = vunpack.c.l.b16 %v727
        %v736 = vpack.c.b16 %v735, %v735
        %737 = vrot.lane.b32.xlu0 %v736, 104
        %v738 = vpop.permute.xlu0 %737
        %v740 = vsel %vm515, %v733, 0
        %v743 = vsel %vm515, %v738, 0
        %745 = vmatpush.bf16.xpose.msra.mxu0 0
        %746 = vmatpush.bf16.xpose.msra.mxu0 0
        %747 = vmatpush.bf16.xpose.msra.mxu0 0
        %748 = vmatpush.bf16.xpose.msra.mxu0 0
        %749 = vmatpush.bf16.xpose.msra.mxu0 0
        %750 = vmatpush.bf16.xpose.msra.mxu0 0
        %751 = vmatpush.bf16.xpose.msra.mxu0 0
        %752 = vmatpush.bf16.xpose.msra.mxu0 %v743
        %753 = vmatmul.bf16.gmra.mxu0 %v740
        %v754 = vpop.f32.mrf.mxu0
        %v755 = vadd.f32 0.0, %v754
        %v756 = vpop.f32.mrf.mxu0
        %757 = vdwg.mxu0
        %v758 = vmul.f32 %v755, 0.35355338
        %v759 = vadd.f32 %v758, %v511
        %v760 = vsel %vm515, %v759, -inf
        %761 = vmax.xlane.f32.xlu0 %v760
        %v762 = vpop.xlane.xlu0 %761
        %v763 = vsub.f32 %v759, %v762
        %v764 = vmul.f32 %v763, 1.442695
        %v765 = vpow.pop %v764
        %v766 = vsel %vm515, %v765, 0.0
        %767 = vadd.xlane.f32.xlu0 %v766
        %v768 = vpop.xlane.xlu0 %767
        %v769 = vrcp.pop %v768
        %v770 = vmul.f32 %v765, %v769
        %v771 = vpack.c.bf16 %v770, %v770
        %v773 = vunpack.c.l.b16 %v728
        %v774 = vpack.c.b16 %v773, %v773
        %775 = vrot.lane.b32.xlu0 %v774, 104
        %v776 = vpop.permute.xlu0 %775
        %v778 = vsel %vm515, %v771, 0
        %v781 = vsel %vm552, %v776, 0
        %783 = vmatpush.bf16.msra.mxu0 0
        %784 = vmatpush.bf16.msra.mxu0 0
        %785 = vmatpush.bf16.msra.mxu0 0
        %786 = vmatpush.bf16.msra.mxu0 0
        %787 = vmatpush.bf16.msra.mxu0 0
        %788 = vmatpush.bf16.msra.mxu0 0
        %789 = vmatpush.bf16.msra.mxu0 0
        %790 = vmatpush.bf16.msra.mxu0 %v781
        %791 = vmatmul.bf16.gmra.mxu0 %v778
        %v792 = vpop.f32.mrf.mxu0
        %v793 = vadd.f32 0.0, %v792
        %v794 = vpop.f32.mrf.mxu0
        %795 = vdwg.mxu0
        %v796 = vpack.c.bf16 %v793, %v793
        %798 = vrot.lane.b32.xlu0 %v796, 24
        %v799 = vpop.permute.xlu0 %798
        %vm801 = vcmask 257216
        %802 = vst.msk [vmem:[#allocation5] sm:$0xf] %vm801, %v799
        %v803 = vld [vmem:[#allocation5] sm:$0xf]
        %v804 = vld [vmem:[#allocation14] sm:$0xf]
        %v805 = vld [vmem:[#allocation14 + $0x4] sm:$0xf]
        %v806 = vld [vmem:[#allocation14 + $0x8] sm:$0xf]
        %v807 = vld [vmem:[#allocation14 + $0xc] sm:$0xf]
        %v808 = vld [vmem:[%s6] sm:$0x1]
        %v810 = vperm.slane %v808, 0
        %v816 = vunpack.c.l.b16 %v804
        %v817 = vunpack.c.l.b16 %v805
        %v818 = vunpack.c.l.b16 %v806
        %v819 = vunpack.c.l.b16 %v807
        %v820 = vpack.c.b16 %v817, %v816
        %v821 = vpack.c.b16 %v819, %v818
        %v825 = vsel %vm482, %v803, 0
        %827 = vmatpush.bf16.msra.mxu0 0
        %828 = vmatpush.bf16.msra.mxu0 0
        %829 = vmatpush.bf16.msra.mxu0 0
        %830 = vmatpush.bf16.msra.mxu0 0
        %831 = vmatpush.bf16.msra.mxu0 0
        %832 = vmatpush.bf16.msra.mxu0 0
        %833 = vmatpush.bf16.msra.mxu0 %v821
        %834 = vmatpush.bf16.msra.mxu0 %v820
        %835 = vmatmul.bf16.gmra.mxu0 %v825
        %v836 = vpop.f32.mrf.mxu0
        %v837 = vadd.f32 %v810, %v836
        %v838 = vpop.f32.mrf.mxu0
        %839 = vdwg.mxu0
        %v840 = vunpack.c.l.bf16 %v461
        %v841 = vadd.f32 %v837, %v840
        %v842 = vsel %vm482, %v841, 0.0
        %843 = vadd.xlane.f32.xlu0 %v842
        %v844 = vpop.xlane.xlu0 %843
        %v845 = vrcp.pop 32.0
        %v846 = vmul.f32 32.0, %v845
        %v847 = vsub.f32 1.0, %v846
        %v848 = vmul.f32 %v845, %v847
        %v849 = vadd.f32 %v845, %v848
        %vm850 = vweird.f32 %v845
        %v851 = vsel %vm850, %v845, %v849
        %v852 = vmul.f32 %v844, %v851
        %v853 = vsub.f32 %v841, %v852
        %v854 = vmul.f32 %v853, %v853
        %v855 = vsel %vm482, %v854, 0.0
        %856 = vadd.xlane.f32.xlu0 %v855
        %v857 = vpop.xlane.xlu0 %856
        %v858 = vmul.f32 %v857, %v851
        %v859 = vadd.f32 %v858, 1e-12
        %v860 = vrsqrt.pop %v859
        %v861 = vmul.f32 %v860, %v859
        %v862 = vmul.f32 %v861, %v860
        %v863 = vmul.f32 0.5, %v862
        %v864 = vsub.f32 1.5, %v863
        %v865 = vmul.f32 %v860, %v864
        %vm866 = vweird.f32 %v859
        %vm867 = vweird.f32 %v860
        %vm868 = vmor %vm866, %vm867
        %v869 = vsel %vm868, %v860, %v865
        %v870 = vmul.f32 %v853, %v869
        %v871 = vld [vmem:[%s7] sm:$0x1]
        %v873 = vperm.slane %v871, 0
        %v875 = vmul.f32 %v870, %v873
        %v876 = vld [vmem:[%s8] sm:$0x1]
        %v878 = vperm.slane %v876, 0
        %v880 = vadd.f32 %v875, %v878
        %v881 = vpack.c.bf16 %v880, %v880
        %882 = vst.msk [vmem:[%s459] sm:$0xf] %vm500, %v881
        %s883 = sand.u32 %s258, 1
        %s884 = scalar_lea.sflag [#allocation8], %s883
        %s885 = sand.u32 %s258, 1
        %s886 = smul.addr %s885, 4
        %s887 = scalar_lea.vmem [#allocation15], %s886
        // Predicated region
        $region77: #{tpu_custom_call.1} parent=55 // pred_check
          %p888 = pneg %p268
        $region78: #{tpu_custom_call.1} parent=55 // pred_check_branch
          %890 = sbr.rel (%p888) target = $region80
        $region79: #{tpu_custom_call.1} parent=55 // pred_region
          %892 = vsyncadd %s884, 0
          %s893 = sadd.s32 %s35, %s34
          %s894 = smul.addr %s893, 4
          %s895 = scalar_lea.hbm %s9, %s894
          %s897 = sshll.u32 %s887, 4
          %s898 = int_to_ptr.vmem [resolvable:$true] %s897
          %s899 = sshll.u32 %s895, 4
          %s900 = int_to_ptr.hbm [resolvable:$true] %s899
          %902 = dma.vmem_to_hbm [thread:$0]  %s898, 64, %s900, %s884
        $region80: #{tpu_custom_call.1} parent=55 // pred_fallthru
          _
      $region56: #{tpu_custom_call.1} parent=5 // pred_fallthru
        _
      %p903 = scmp.le.s32.totalorder 2, %s25
      // Predicated region
      $region81: #{tpu_custom_call.1} parent=5 // pred_check
        %p904 = pneg %p903
      $region82: #{tpu_custom_call.1} parent=5 // pred_check_branch
        %906 = sbr.rel (%p904) target = $region84
      $region83: #{tpu_custom_call.1} parent=5 // pred_region
        %s907 = ssub.s32 %s25, 2
        // Predicated region
        $region85: #{tpu_custom_call.1} parent=83 // pred_check
          %p908 = pneg %p274
        $region86: #{tpu_custom_call.1} parent=83 // pred_check_branch
          %910 = sbr.rel (%p908) target = $region88
        $region87: #{tpu_custom_call.1} parent=83 // pred_region
          %s911 = sand.u32 %s259, 1
          %s912 = scalar_lea.sflag [#allocation8], %s911
          %s913 = sand.u32 %s259, 1
          %s914 = smul.addr %s913, 4
          %s915 = scalar_lea.vmem [#allocation15], %s914
          %917 = dma.done %s912, 64
        $region88: #{tpu_custom_call.1} parent=83 // pred_fallthru
          _
      $region84: #{tpu_custom_call.1} parent=5 // pred_fallthru
        _
    $region6: #{tpu_custom_call.1} parent=1 // loop_footer
      %s29 = sadd.s32 1, %s25
    $region7: #{tpu_custom_call.1} parent=1 // loop_footer_branch
      %24 = sbr.rel target = $region3
    $region8: #{tpu_custom_call.1} parent=1 // loop_exit
      _
    %918 = vsyncpa [#allocation7], 1
    %s919 = scalar_lea.sflag [#allocation7], 1
    %920 = vsyncpa %s919, 1
    %921 = vsyncpa [#allocation10], 1
    %s922 = scalar_lea.sflag [#allocation10], 1
    %923 = vsyncpa %s922, 1
    %924 = vsyncpa [#allocation13], 1
    %925 = vsyncpa [#allocation8], 1
    %s926 = scalar_lea.sflag [#allocation8], 1
    %927 = vsyncpa %s926, 1

</llo_original>
